<compile_context>
chip_gen: v6e
topology: v6e:2x2x1
jax: 0.10.0
libtpu: 0.0.40
codegen_flags: <defaults>
</compile_context>

<pallas_src>
import functools
import math

import jax
import jax.numpy as jnp
from jax.experimental import pallas as pl
from jax.experimental.pallas import tpu as pltpu

LN_EPS = 1e-5


def _layer_norm(x, gamma, beta):
    # One-pass variance (E[x^2] - mean^2): halves the cross-lane XLU reductions.
    mu = jnp.mean(x, axis=-1, keepdims=True)
    ms = jnp.mean(x * x, axis=-1, keepdims=True)
    var = jnp.maximum(ms - mu * mu, 0.0)
    return (x - mu) * jax.lax.rsqrt(var + LN_EPS) * gamma + beta


def _gelu_exact(x):
    # nn.GELU default = exact (erf) GELU
    return 0.5 * x * (1.0 + jax.lax.erf(x * (1.0 / math.sqrt(2.0))))


# --------------------------------------------------------------------------
# Fused layer kernel:  PreNorm(Attention)+residual  ->  PreNorm(FF)+residual
# --------------------------------------------------------------------------
def layer_kernel(x_ref, aln_g_ref, aln_b_ref, wqkv_ref, wproj_ref, bproj_ref,
                 fln_g_ref, fln_b_ref, w1_ref, b1_ref, w2_ref, b2_ref,
                 attn_x_ref, out_ref, *, num_heads, scale):
    bf16 = jnp.bfloat16
    x = x_ref[0]                                   # (N, C) f32
    N, C = x.shape
    hd = C // num_heads

    # ----------------------- PreNorm(Attention) + residual -----------------------
    xn = _layer_norm(x, aln_g_ref[0], aln_b_ref[0])
    qkv = jnp.dot(xn.astype(bf16), wqkv_ref[...],
                  preferred_element_type=jnp.float32)          # (N, 3C) f32

    # Head split (layout ops in f32; bf16 only at the MXU operands).
    # Scale is folded into q here: N*hd multiplies instead of N*N on the scores.
    q = (qkv[:, 0 * C:1 * C] * scale).reshape(N, num_heads, hd).transpose(1, 0, 2)
    k = qkv[:, 1 * C:2 * C].reshape(N, num_heads, hd).transpose(1, 0, 2)
    v = qkv[:, 2 * C:3 * C].reshape(N, num_heads, hd).transpose(1, 0, 2)

    # Batched-over-heads score matmul + online-free softmax + batched p@v.
    # TODO(synk): for long sequences, tile this flash-style (q-block outer,
    # kv-block inner with online softmax) instead of materializing (H, N, N).
    s = jnp.einsum("hqd,hkd->hqk", q.astype(bf16), k.astype(bf16),
                   preferred_element_type=jnp.float32)         # (H, N, N) f32
    s = s - jnp.max(s, axis=-1, keepdims=True)
    p = jnp.exp(s)
    p = p * pl.reciprocal(jnp.sum(p, axis=-1, keepdims=True), approx=True)

    o = jnp.einsum("hqk,hkd->hqd", p.astype(bf16), v.astype(bf16),
                   preferred_element_type=jnp.float32)         # (H, N, hd) f32
    attn = o.transpose(1, 0, 2).reshape(N, C)                  # (N, C) f32

    proj = jnp.dot(attn.astype(bf16), wproj_ref[...],
                   preferred_element_type=jnp.float32) + bproj_ref[0]
    x1 = x + proj
    attn_x_ref[0] = x1.astype(attn_x_ref.dtype)

    # ----------------------- PreNorm(FeedForward) + residual ---------------------
    xn2 = _layer_norm(x1, fln_g_ref[0], fln_b_ref[0])
    h = jnp.dot(xn2.astype(bf16), w1_ref[...],
                preferred_element_type=jnp.float32) + b1_ref[0]
    g = _gelu_exact(h)
    y = jnp.dot(g.astype(bf16), w2_ref[...],
                preferred_element_type=jnp.float32) + b2_ref[0]
    out_ref[0] = (x1 + y).astype(out_ref.dtype)


def transformer_layer(x, p, *, num_heads):
    """One transformer layer.  Returns (x_after_attention, x_after_ff)."""
    B, N, C = x.shape
    H = p["w1"].shape[1]
    scale = (C // num_heads) ** -0.5
    kernel = functools.partial(layer_kernel, num_heads=num_heads, scale=scale)
    full = lambda b: (0, 0)

    # TODO(synk): for production dims (C~1024, H~4096) add grid axes over N and the
    # MLP hidden dim (f32 VMEM accumulator + pl.when init/finalize for w2) so that
    # weights + intermediates fit v7x's 64 MiB VMEM and both TensorCores get work
    # even when B is small.
    return pl.pallas_call(
        kernel,
        out_shape=(jax.ShapeDtypeStruct((B, N, C), x.dtype),   # post-attention x
                   jax.ShapeDtypeStruct((B, N, C), x.dtype)),  # post-FF x
        grid=(B,),
        in_specs=[
            pl.BlockSpec((1, N, C), lambda b: (b, 0, 0)),      # x
            pl.BlockSpec((1, C), full),                        # attn LN gamma
            pl.BlockSpec((1, C), full),                        # attn LN beta
            pl.BlockSpec((C, 3 * C), full),                    # wqkv  (bf16)
            pl.BlockSpec((C, C), full),                        # wproj (bf16)
            pl.BlockSpec((1, C), full),                        # bproj
            pl.BlockSpec((1, C), full),                        # ff LN gamma
            pl.BlockSpec((1, C), full),                        # ff LN beta
            pl.BlockSpec((C, H), full),                        # w1 (bf16)
            pl.BlockSpec((1, H), full),                        # b1
            pl.BlockSpec((H, C), full),                        # w2 (bf16)
            pl.BlockSpec((1, C), full),                        # b2
        ],
        out_specs=(pl.BlockSpec((1, N, C), lambda b: (b, 0, 0)),
                   pl.BlockSpec((1, N, C), lambda b: (b, 0, 0))),
        compiler_params=pltpu.CompilerParams(
            dimension_semantics=("parallel",),
            vmem_limit_bytes=32 * 1024 * 1024),
    )(x, p["attn_ln_g"], p["attn_ln_b"], p["wqkv"], p["wproj"], p["bproj"],
      p["ff_ln_g"], p["ff_ln_b"], p["w1"], p["b1"], p["w2"], p["b2"])


def transformer_forward(params, x, *, num_heads):
    hidden_states, attentions = [], []
    for p in params:
        attn_x, x = transformer_layer(x, p, num_heads=num_heads)
        attentions.append(attn_x)     # matches PyTorch: appends post-residual x
        hidden_states.append(x)
    return x, hidden_states, attentions


# --------------------------------------------------------------------------
# Parameter init (xavier-uniform, biases zero; LN gamma=1, beta=0)
# Linear weights stored transposed (in, out) and in bf16 for the MXU.
# --------------------------------------------------------------------------
def _xavier(key, fan_in, fan_out):
    bound = math.sqrt(6.0 / (fan_in + fan_out))
    w = jax.random.uniform(key, (fan_in, fan_out), jnp.float32, -bound, bound)
    return w.astype(jnp.bfloat16)


def init_transformer_params(key, dim, depth, mlp_dim):
    layers = []
    for _ in range(depth):
        key, k1, k2, k3, k4 = jax.random.split(key, 5)
        layers.append(dict(
            attn_ln_g=jnp.ones((1, dim), jnp.float32),
            attn_ln_b=jnp.zeros((1, dim), jnp.float32),
            wqkv=_xavier(k1, dim, 3 * dim),
            wproj=_xavier(k2, dim, dim),
            bproj=jnp.zeros((1, dim), jnp.float32),
            ff_ln_g=jnp.ones((1, dim), jnp.float32),
            ff_ln_b=jnp.zeros((1, dim), jnp.float32),
            w1=_xavier(k3, dim, mlp_dim),
            b1=jnp.zeros((1, mlp_dim), jnp.float32),
            w2=_xavier(k4, mlp_dim, dim),
            b2=jnp.zeros((1, dim), jnp.float32),
        ))
    return layers


# --------------------------------------------------------------------------
# Pure-JAX references for sanity checks
# --------------------------------------------------------------------------
def _ref_forward_mirror(params, x, num_heads):
    """Mirrors the kernel's bf16-operand / f32-accumulate math (tight check)."""
    B, N, C = x.shape
    hd = C // num_heads
    scale = hd ** -0.5
    bf = jnp.bfloat16
    hidden, attns = [], []
    for p in params:
        xn = _layer_norm(x, p["attn_ln_g"][0], p["attn_ln_b"][0])
        qkv = jnp.einsum("bnc,ck->bnk", xn.astype(bf), p["wqkv"],
                         preferred_element_type=jnp.float32)
        q = (qkv[..., :C] * scale).reshape(B, N, num_heads, hd).transpose(0, 2, 1, 3)
        k = qkv[..., C:2 * C].reshape(B, N, num_heads, hd).transpose(0, 2, 1, 3)
        v = qkv[..., 2 * C:].reshape(B, N, num_heads, hd).transpose(0, 2, 1, 3)
        s = jnp.einsum("bhqd,bhkd->bhqk", q.astype(bf), k.astype(bf),
                       preferred_element_type=jnp.float32)
        s = s - jnp.max(s, axis=-1, keepdims=True)
        e = jnp.exp(s)
        a = e / jnp.sum(e, axis=-1, keepdims=True)
        o = jnp.einsum("bhqk,bhkd->bhqd", a.astype(bf), v.astype(bf),
                       preferred_element_type=jnp.float32)
        o = o.transpose(0, 2, 1, 3).reshape(B, N, C)
        x = x + jnp.einsum("bnc,cd->bnd", o.astype(bf), p["wproj"],
                           preferred_element_type=jnp.float32) + p["bproj"][0]
        attns.append(x)
        xn2 = _layer_norm(x, p["ff_ln_g"][0], p["ff_ln_b"][0])
        h = jnp.einsum("bnc,ch->bnh", xn2.astype(bf), p["w1"],
                       preferred_element_type=jnp.float32) + p["b1"][0]
        g = _gelu_exact(h)
        x = x + jnp.einsum("bnh,hc->bnc", g.astype(bf), p["w2"],
                           preferred_element_type=jnp.float32) + p["b2"][0]
        hidden.append(x)
    return x, hidden, attns


def _ref_forward_f32(params, x, num_heads):
    """Full f32-activation reference (loose check against bf16 kernel)."""
    B, N, C = x.shape
    hd = C // num_heads
    scale = hd ** -0.5
    hidden, attns = [], []
    for p in params:
        wqkv = p["wqkv"].astype(jnp.float32)
        wproj = p["wproj"].astype(jnp.float32)
        w1 = p["w1"].astype(jnp.float32)
        w2 = p["w2"].astype(jnp.float32)
        xn = _layer_norm(x, p["attn_ln_g"][0], p["attn_ln_b"][0])
        qkv = (xn @ wqkv).reshape(B, N, 3, num_heads, hd).transpose(2, 0, 3, 1, 4)
        q, k, v = qkv[0], qkv[1], qkv[2]
        a = jax.nn.softmax(jnp.einsum("bhnd,bhmd->bhnm", q, k) * scale, axis=-1)
        o = jnp.einsum("bhnm,bhmd->bhnd", a, v).transpose(0, 2, 1, 3).reshape(B, N, C)
        x = x + o @ wproj + p["bproj"][0]
        attns.append(x)
        xn2 = _layer_norm(x, p["ff_ln_g"][0], p["ff_ln_b"][0])
        h = jax.nn.gelu(xn2 @ w1 + p["b1"][0], approximate=False)
        x = x + h @ w2 + p["b2"][0]
        hidden.append(x)
    return x, hidden, attns


if __name__ == "__main__":
    # Small but lane-dense config: C=128, 3C=384, mlp=256 are multiples of 128.
    B, N, dim, heads, mlp_dim, depth = 2, 16, 128, 4, 256, 2

    key = jax.random.PRNGKey(0)
    key, kx, kp = jax.random.split(key, 3)
    x = jax.random.normal(kx, (B, N, dim), jnp.float32)
    params = init_transformer_params(kp, dim, depth, mlp_dim)

    out, hidden_states, attentions = transformer_forward(params, x, num_heads=heads)
    jax.block_until_ready(out)

    # Tight check vs a reference that mirrors the kernel's bf16/f32 mixed precision.
    m_out, m_hidden, m_attn = _ref_forward_mirror(params, x, heads)
    assert jnp.allclose(out, m_out, rtol=2e-2, atol=2e-2)
    for a, b in zip(hidden_states, m_hidden):
        assert jnp.allclose(a, b, rtol=2e-2, atol=2e-2)
    for a, b in zip(attentions, m_attn):
        assert jnp.allclose(a, b, rtol=2e-2, atol=2e-2)

    # Loose check vs a full-f32-activation reference.
    f_out, _, _ = _ref_forward_f32(params, x, heads)
    assert jnp.allclose(out, f_out, rtol=5e-2, atol=5e-2)

    print("KERNEL_OK")
</pallas_src>

<mosaic_0001>
module attributes {stable_mosaic.version = 11 : i64} {
  func.func @layer_kernel(%arg0: i32, %arg1: memref<1x16x128xf32, #tpu.memory_space<vmem>>, %arg2: memref<1x128xf32, #tpu.memory_space<vmem>>, %arg3: memref<1x128xf32, #tpu.memory_space<vmem>>, %arg4: memref<128x384xbf16, #tpu.memory_space<vmem>>, %arg5: memref<128x128xbf16, #tpu.memory_space<vmem>>, %arg6: memref<1x128xf32, #tpu.memory_space<vmem>>, %arg7: memref<1x128xf32, #tpu.memory_space<vmem>>, %arg8: memref<1x128xf32, #tpu.memory_space<vmem>>, %arg9: memref<128x256xbf16, #tpu.memory_space<vmem>>, %arg10: memref<1x256xf32, #tpu.memory_space<vmem>>, %arg11: memref<256x128xbf16, #tpu.memory_space<vmem>>, %arg12: memref<1x128xf32, #tpu.memory_space<vmem>>, %arg13: memref<1x16x128xf32, #tpu.memory_space<vmem>>, %arg14: memref<1x16x128xf32, #tpu.memory_space<vmem>>) attributes {dimension_semantics = [#tpu.dimension_semantics<parallel>], iteration_bounds = array<i64: 2>, scalar_prefetch = 0 : i64, scratch_operands = 0 : i64, tpu.core_type = #tpu.core_type<tc>, window_params = [{transform_indices = @transform_0, window_bounds = array<i64: 1, 16, 128>}, {pipeline_mode = #tpu.pipeline_mode<synchronous>, transform_indices = @transform_1, window_bounds = array<i64: 1, 128>}, {pipeline_mode = #tpu.pipeline_mode<synchronous>, transform_indices = @transform_2, window_bounds = array<i64: 1, 128>}, {pipeline_mode = #tpu.pipeline_mode<synchronous>, transform_indices = @transform_3, window_bounds = array<i64: 128, 384>}, {pipeline_mode = #tpu.pipeline_mode<synchronous>, transform_indices = @transform_4, window_bounds = array<i64: 128, 128>}, {pipeline_mode = #tpu.pipeline_mode<synchronous>, transform_indices = @transform_5, window_bounds = array<i64: 1, 128>}, {pipeline_mode = #tpu.pipeline_mode<synchronous>, transform_indices = @transform_6, window_bounds = array<i64: 1, 128>}, {pipeline_mode = #tpu.pipeline_mode<synchronous>, transform_indices = @transform_7, window_bounds = array<i64: 1, 128>}, {pipeline_mode = #tpu.pipeline_mode<synchronous>, transform_indices = @transform_8, window_bounds = array<i64: 128, 256>}, {pipeline_mode = #tpu.pipeline_mode<synchronous>, transform_indices = @transform_9, window_bounds = array<i64: 1, 256>}, {pipeline_mode = #tpu.pipeline_mode<synchronous>, transform_indices = @transform_10, window_bounds = array<i64: 256, 128>}, {pipeline_mode = #tpu.pipeline_mode<synchronous>, transform_indices = @transform_11, window_bounds = array<i64: 1, 128>}, {transform_indices = @transform_12, window_bounds = array<i64: 1, 16, 128>}, {transform_indices = @transform_13, window_bounds = array<i64: 1, 16, 128>}]} {
    %c0 = arith.constant 0 : index
    %c0_0 = arith.constant 0 : index
    %c0_1 = arith.constant 0 : index
    %0 = vector.load %arg1[%c0, %c0_0, %c0_1] : memref<1x16x128xf32, #tpu.memory_space<vmem>>, vector<1x16x128xf32>
    %1 = vector.shape_cast %0 : vector<1x16x128xf32> to vector<16x128xf32>
    %c0_2 = arith.constant 0 : index
    %c0_3 = arith.constant 0 : index
    %2 = vector.load %arg2[%c0_2, %c0_3] : memref<1x128xf32, #tpu.memory_space<vmem>>, vector<1x128xf32>
    %3 = vector.shape_cast %2 : vector<1x128xf32> to vector<128xf32>
    %c0_4 = arith.constant 0 : index
    %c0_5 = arith.constant 0 : index
    %4 = vector.load %arg3[%c0_4, %c0_5] : memref<1x128xf32, #tpu.memory_space<vmem>>, vector<1x128xf32>
    %5 = vector.shape_cast %4 : vector<1x128xf32> to vector<128xf32>
    %cst = arith.constant dense<0.000000e+00> : vector<16xf32>
    %6 = vector.multi_reduction <add>, %1, %cst [1] : vector<16x128xf32> to vector<16xf32>
    %7 = vector.shape_cast %6 : vector<16xf32> to vector<16x1xf32>
    %cst_6 = arith.constant 1.280000e+02 : f32
    %8 = vector.broadcast %cst_6 : f32 to vector<16x1xf32>
    %9 = arith.divf %7, %8 : vector<16x1xf32>
    %10 = arith.mulf %1, %1 : vector<16x128xf32>
    %cst_7 = arith.constant dense<0.000000e+00> : vector<16xf32>
    %11 = vector.multi_reduction <add>, %10, %cst_7 [1] : vector<16x128xf32> to vector<16xf32>
    %12 = vector.shape_cast %11 : vector<16xf32> to vector<16x1xf32>
    %cst_8 = arith.constant 1.280000e+02 : f32
    %13 = vector.broadcast %cst_8 : f32 to vector<16x1xf32>
    %14 = arith.divf %12, %13 : vector<16x1xf32>
    %15 = arith.mulf %9, %9 : vector<16x1xf32>
    %16 = arith.subf %14, %15 : vector<16x1xf32>
    %cst_9 = arith.constant 0.000000e+00 : f32
    %17 = vector.broadcast %cst_9 : f32 to vector<16x1xf32>
    %18 = arith.maximumf %16, %17 : vector<16x1xf32>
    %19 = vector.broadcast %9 : vector<16x1xf32> to vector<16x128xf32>
    %20 = arith.subf %1, %19 : vector<16x128xf32>
    %cst_10 = arith.constant 9.99999974E-6 : f32
    %21 = vector.broadcast %cst_10 : f32 to vector<16x1xf32>
    %22 = arith.addf %18, %21 : vector<16x1xf32>
    %23 = math.rsqrt %22 : vector<16x1xf32>
    %24 = vector.broadcast %23 : vector<16x1xf32> to vector<16x128xf32>
    %25 = arith.mulf %20, %24 : vector<16x128xf32>
    %26 = vector.shape_cast %3 : vector<128xf32> to vector<1x128xf32>
    %27 = vector.broadcast %26 : vector<1x128xf32> to vector<16x128xf32>
    %28 = arith.mulf %25, %27 : vector<16x128xf32>
    %29 = vector.shape_cast %5 : vector<128xf32> to vector<1x128xf32>
    %30 = vector.broadcast %29 : vector<1x128xf32> to vector<16x128xf32>
    %31 = arith.addf %28, %30 : vector<16x128xf32>
    %32 = arith.truncf %31 : vector<16x128xf32> to vector<16x128xbf16>
    %c0_11 = arith.constant 0 : index
    %c0_12 = arith.constant 0 : index
    %33 = vector.load %arg4[%c0_11, %c0_12] : memref<128x384xbf16, #tpu.memory_space<vmem>>, vector<128x384xbf16>
    %cst_13 = arith.constant dense<0.000000e+00> : vector<16x384xf32>
    %34 = tpu.matmul %32, %33, %cst_13 {dimension_numbers = #tpu.dot_dimension_numbers<[1], [0], [0], [1], [0, 0, 1, 1], [], []>} : vector<16x128xbf16>, vector<128x384xbf16>, vector<16x384xf32> -> vector<16x384xf32>
    %35 = vector.extract_strided_slice %34 {offsets = [0, 0], sizes = [16, 128], strides = [1, 1]} : vector<16x384xf32> to vector<16x128xf32>
    %cst_14 = arith.constant 0.176776692 : f32
    %36 = vector.broadcast %cst_14 : f32 to vector<16x128xf32>
    %37 = arith.mulf %35, %36 : vector<16x128xf32>
    %38 = vector.shape_cast %37 : vector<16x128xf32> to vector<16x4x32xf32>
    %39 = tpu.transpose %38, [1, 0, 2] : vector<16x4x32xf32> -> vector<4x16x32xf32>
    %40 = vector.extract_strided_slice %34 {offsets = [0, 128], sizes = [16, 128], strides = [1, 1]} : vector<16x384xf32> to vector<16x128xf32>
    %41 = vector.shape_cast %40 : vector<16x128xf32> to vector<16x4x32xf32>
    %42 = tpu.transpose %41, [1, 0, 2] : vector<16x4x32xf32> -> vector<4x16x32xf32>
    %43 = vector.extract_strided_slice %34 {offsets = [0, 256], sizes = [16, 128], strides = [1, 1]} : vector<16x384xf32> to vector<16x128xf32>
    %44 = vector.shape_cast %43 : vector<16x128xf32> to vector<16x4x32xf32>
    %45 = tpu.transpose %44, [1, 0, 2] : vector<16x4x32xf32> -> vector<4x16x32xf32>
    %46 = arith.truncf %39 : vector<4x16x32xf32> to vector<4x16x32xbf16>
    %47 = arith.truncf %42 : vector<4x16x32xf32> to vector<4x16x32xbf16>
    "tpu.trace_start"() <{level = 10 : i32, message = "hqd,hkd->hqk"}> : () -> ()
    %cst_15 = arith.constant dense<0.000000e+00> : vector<4x16x16xf32>
    %48 = tpu.matmul %46, %47, %cst_15 {dimension_numbers = #tpu.dot_dimension_numbers<[2], [2], [1], [1], [0, 0, 0, 1, 1, 1], [0], [0]>} : vector<4x16x32xbf16>, vector<4x16x32xbf16>, vector<4x16x16xf32> -> vector<4x16x16xf32>
    "tpu.trace_stop"() : () -> ()
    %cst_16 = arith.constant dense<0xFF800000> : vector<4x16xf32>
    %49 = vector.multi_reduction <maximumf>, %48, %cst_16 [2] : vector<4x16x16xf32> to vector<4x16xf32>
    %50 = vector.shape_cast %49 : vector<4x16xf32> to vector<4x16x1xf32>
    %51 = vector.broadcast %50 : vector<4x16x1xf32> to vector<4x16x16xf32>
    %52 = arith.subf %48, %51 : vector<4x16x16xf32>
    %53 = math.exp %52 : vector<4x16x16xf32>
    %cst_17 = arith.constant dense<0.000000e+00> : vector<4x16xf32>
    %54 = vector.multi_reduction <add>, %53, %cst_17 [2] : vector<4x16x16xf32> to vector<4x16xf32>
    %55 = vector.shape_cast %54 : vector<4x16xf32> to vector<4x16x1xf32>
    %56 = tpu.reciprocal %55 {approx = true} : vector<4x16x1xf32> -> vector<4x16x1xf32>
    %57 = vector.broadcast %56 : vector<4x16x1xf32> to vector<4x16x16xf32>
    %58 = arith.mulf %53, %57 : vector<4x16x16xf32>
    %59 = arith.truncf %58 : vector<4x16x16xf32> to vector<4x16x16xbf16>
    %60 = arith.truncf %45 : vector<4x16x32xf32> to vector<4x16x32xbf16>
    "tpu.trace_start"() <{level = 10 : i32, message = "hqk,hkd->hqd"}> : () -> ()
    %cst_18 = arith.constant dense<0.000000e+00> : vector<4x16x32xf32>
    %61 = tpu.matmul %59, %60, %cst_18 {dimension_numbers = #tpu.dot_dimension_numbers<[2], [1], [1], [2], [0, 0, 0, 1, 1, 2], [0], [0]>} : vector<4x16x16xbf16>, vector<4x16x32xbf16>, vector<4x16x32xf32> -> vector<4x16x32xf32>
    "tpu.trace_stop"() : () -> ()
    %62 = tpu.transpose %61, [1, 0, 2] : vector<4x16x32xf32> -> vector<16x4x32xf32>
    %63 = vector.shape_cast %62 : vector<16x4x32xf32> to vector<16x128xf32>
    %64 = arith.truncf %63 : vector<16x128xf32> to vector<16x128xbf16>
    %c0_19 = arith.constant 0 : index
    %c0_20 = arith.constant 0 : index
    %65 = vector.load %arg5[%c0_19, %c0_20] : memref<128x128xbf16, #tpu.memory_space<vmem>>, vector<128x128xbf16>
    %cst_21 = arith.constant dense<0.000000e+00> : vector<16x128xf32>
    %66 = tpu.matmul %64, %65, %cst_21 {dimension_numbers = #tpu.dot_dimension_numbers<[1], [0], [0], [1], [0, 0, 1, 1], [], []>} : vector<16x128xbf16>, vector<128x128xbf16>, vector<16x128xf32> -> vector<16x128xf32>
    %c0_22 = arith.constant 0 : index
    %c0_23 = arith.constant 0 : index
    %67 = vector.load %arg6[%c0_22, %c0_23] : memref<1x128xf32, #tpu.memory_space<vmem>>, vector<1x128xf32>
    %68 = vector.shape_cast %67 : vector<1x128xf32> to vector<128xf32>
    %69 = vector.shape_cast %68 : vector<128xf32> to vector<1x128xf32>
    %70 = vector.broadcast %69 : vector<1x128xf32> to vector<16x128xf32>
    %71 = arith.addf %66, %70 : vector<16x128xf32>
    %72 = arith.addf %1, %71 : vector<16x128xf32>
    %c0_24 = arith.constant 0 : index
    %c0_25 = arith.constant 0 : index
    %c0_26 = arith.constant 0 : index
    %73 = vector.load %arg13[%c0_24, %c0_25, %c0_26] : memref<1x16x128xf32, #tpu.memory_space<vmem>>, vector<1x16x128xf32>
    %74 = vector.shape_cast %73 : vector<1x16x128xf32> to vector<16x128xf32>
    %75 = vector.shape_cast %72 : vector<16x128xf32> to vector<1x16x128xf32>
    tpu.vector_store %arg13[%c0_24, %c0_25, %c0_26], %75 {strides = array<i32>} : memref<1x16x128xf32, #tpu.memory_space<vmem>>, vector<1x16x128xf32>,
    %c0_27 = arith.constant 0 : index
    %c0_28 = arith.constant 0 : index
    %76 = vector.load %arg7[%c0_27, %c0_28] : memref<1x128xf32, #tpu.memory_space<vmem>>, vector<1x128xf32>
    %77 = vector.shape_cast %76 : vector<1x128xf32> to vector<128xf32>
    %c0_29 = arith.constant 0 : index
    %c0_30 = arith.constant 0 : index
    %78 = vector.load %arg8[%c0_29, %c0_30] : memref<1x128xf32, #tpu.memory_space<vmem>>, vector<1x128xf32>
    %79 = vector.shape_cast %78 : vector<1x128xf32> to vector<128xf32>
    %cst_31 = arith.constant dense<0.000000e+00> : vector<16xf32>
    %80 = vector.multi_reduction <add>, %72, %cst_31 [1] : vector<16x128xf32> to vector<16xf32>
    %81 = vector.shape_cast %80 : vector<16xf32> to vector<16x1xf32>
    %cst_32 = arith.constant 1.280000e+02 : f32
    %82 = vector.broadcast %cst_32 : f32 to vector<16x1xf32>
    %83 = arith.divf %81, %82 : vector<16x1xf32>
    %84 = arith.mulf %72, %72 : vector<16x128xf32>
    %cst_33 = arith.constant dense<0.000000e+00> : vector<16xf32>
    %85 = vector.multi_reduction <add>, %84, %cst_33 [1] : vector<16x128xf32> to vector<16xf32>
    %86 = vector.shape_cast %85 : vector<16xf32> to vector<16x1xf32>
    %cst_34 = arith.constant 1.280000e+02 : f32
    %87 = vector.broadcast %cst_34 : f32 to vector<16x1xf32>
    %88 = arith.divf %86, %87 : vector<16x1xf32>
    %89 = arith.mulf %83, %83 : vector<16x1xf32>
    %90 = arith.subf %88, %89 : vector<16x1xf32>
    %cst_35 = arith.constant 0.000000e+00 : f32
    %91 = vector.broadcast %cst_35 : f32 to vector<16x1xf32>
    %92 = arith.maximumf %90, %91 : vector<16x1xf32>
    %93 = vector.broadcast %83 : vector<16x1xf32> to vector<16x128xf32>
    %94 = arith.subf %72, %93 : vector<16x128xf32>
    %cst_36 = arith.constant 9.99999974E-6 : f32
    %95 = vector.broadcast %cst_36 : f32 to vector<16x1xf32>
    %96 = arith.addf %92, %95 : vector<16x1xf32>
    %97 = math.rsqrt %96 : vector<16x1xf32>
    %98 = vector.broadcast %97 : vector<16x1xf32> to vector<16x128xf32>
    %99 = arith.mulf %94, %98 : vector<16x128xf32>
    %100 = vector.shape_cast %77 : vector<128xf32> to vector<1x128xf32>
    %101 = vector.broadcast %100 : vector<1x128xf32> to vector<16x128xf32>
    %102 = arith.mulf %99, %101 : vector<16x128xf32>
    %103 = vector.shape_cast %79 : vector<128xf32> to vector<1x128xf32>
    %104 = vector.broadcast %103 : vector<1x128xf32> to vector<16x128xf32>
    %105 = arith.addf %102, %104 : vector<16x128xf32>
    %106 = arith.truncf %105 : vector<16x128xf32> to vector<16x128xbf16>
    %c0_37 = arith.constant 0 : index
    %c0_38 = arith.constant 0 : index
    %107 = vector.load %arg9[%c0_37, %c0_38] : memref<128x256xbf16, #tpu.memory_space<vmem>>, vector<128x256xbf16>
    %cst_39 = arith.constant dense<0.000000e+00> : vector<16x256xf32>
    %108 = tpu.matmul %106, %107, %cst_39 {dimension_numbers = #tpu.dot_dimension_numbers<[1], [0], [0], [1], [0, 0, 1, 1], [], []>} : vector<16x128xbf16>, vector<128x256xbf16>, vector<16x256xf32> -> vector<16x256xf32>
    %c0_40 = arith.constant 0 : index
    %c0_41 = arith.constant 0 : index
    %109 = vector.load %arg10[%c0_40, %c0_41] : memref<1x256xf32, #tpu.memory_space<vmem>>, vector<1x256xf32>
    %110 = vector.shape_cast %109 : vector<1x256xf32> to vector<256xf32>
    %111 = vector.shape_cast %110 : vector<256xf32> to vector<1x256xf32>
    %112 = vector.broadcast %111 : vector<1x256xf32> to vector<16x256xf32>
    %113 = arith.addf %108, %112 : vector<16x256xf32>
    %cst_42 = arith.constant 5.000000e-01 : f32
    %114 = vector.broadcast %cst_42 : f32 to vector<16x256xf32>
    %115 = arith.mulf %114, %113 : vector<16x256xf32>
    %cst_43 = arith.constant 0.707106769 : f32
    %116 = vector.broadcast %cst_43 : f32 to vector<16x256xf32>
    %117 = arith.mulf %113, %116 : vector<16x256xf32>
    %118 = math.erf %117 : vector<16x256xf32>
    %cst_44 = arith.constant 1.000000e+00 : f32
    %119 = vector.broadcast %cst_44 : f32 to vector<16x256xf32>
    %120 = arith.addf %119, %118 : vector<16x256xf32>
    %121 = arith.mulf %115, %120 : vector<16x256xf32>
    %122 = arith.truncf %121 : vector<16x256xf32> to vector<16x256xbf16>
    %c0_45 = arith.constant 0 : index
    %c0_46 = arith.constant 0 : index
    %123 = vector.load %arg11[%c0_45, %c0_46] : memref<256x128xbf16, #tpu.memory_space<vmem>>, vector<256x128xbf16>
    %cst_47 = arith.constant dense<0.000000e+00> : vector<16x128xf32>
    %124 = tpu.matmul %122, %123, %cst_47 {dimension_numbers = #tpu.dot_dimension_numbers<[1], [0], [0], [1], [0, 0, 1, 1], [], []>} : vector<16x256xbf16>, vector<256x128xbf16>, vector<16x128xf32> -> vector<16x128xf32>
    %c0_48 = arith.constant 0 : index
    %c0_49 = arith.constant 0 : index
    %125 = vector.load %arg12[%c0_48, %c0_49] : memref<1x128xf32, #tpu.memory_space<vmem>>, vector<1x128xf32>
    %126 = vector.shape_cast %125 : vector<1x128xf32> to vector<128xf32>
    %127 = vector.shape_cast %126 : vector<128xf32> to vector<1x128xf32>
    %128 = vector.broadcast %127 : vector<1x128xf32> to vector<16x128xf32>
    %129 = arith.addf %124, %128 : vector<16x128xf32>
    %130 = arith.addf %72, %129 : vector<16x128xf32>
    %c0_50 = arith.constant 0 : index
    %c0_51 = arith.constant 0 : index
    %c0_52 = arith.constant 0 : index
    %131 = vector.load %arg14[%c0_50, %c0_51, %c0_52] : memref<1x16x128xf32, #tpu.memory_space<vmem>>, vector<1x16x128xf32>
    %132 = vector.shape_cast %131 : vector<1x16x128xf32> to vector<16x128xf32>
    %133 = vector.shape_cast %130 : vector<16x128xf32> to vector<1x16x128xf32>
    tpu.vector_store %arg14[%c0_50, %c0_51, %c0_52], %133 {strides = array<i32>} : memref<1x16x128xf32, #tpu.memory_space<vmem>>, vector<1x16x128xf32>,
    return
  }
  func.func @transform_0(%arg0: i32) -> (i32, i32, i32) {
    %c0_i32 = arith.constant 0 : i32
    %c0_i32_0 = arith.constant 0 : i32
    %c0_i32_1 = arith.constant 0 : i32
    return %arg0, %c0_i32, %c0_i32_0 : i32, i32, i32
  }
  func.func @transform_1(%arg0: i32) -> (i32, i32) {
    %c0_i32 = arith.constant 0 : i32
    %c0_i32_0 = arith.constant 0 : i32
    %c0_i32_1 = arith.constant 0 : i32
    return %c0_i32, %c0_i32_0 : i32, i32
  }
  func.func @transform_2(%arg0: i32) -> (i32, i32) {
    %c0_i32 = arith.constant 0 : i32
    %c0_i32_0 = arith.constant 0 : i32
    %c0_i32_1 = arith.constant 0 : i32
    return %c0_i32, %c0_i32_0 : i32, i32
  }
  func.func @transform_3(%arg0: i32) -> (i32, i32) {
    %c0_i32 = arith.constant 0 : i32
    %c0_i32_0 = arith.constant 0 : i32
    %c0_i32_1 = arith.constant 0 : i32
    return %c0_i32, %c0_i32_0 : i32, i32
  }
  func.func @transform_4(%arg0: i32) -> (i32, i32) {
    %c0_i32 = arith.constant 0 : i32
    %c0_i32_0 = arith.constant 0 : i32
    %c0_i32_1 = arith.constant 0 : i32
    return %c0_i32, %c0_i32_0 : i32, i32
  }
  func.func @transform_5(%arg0: i32) -> (i32, i32) {
    %c0_i32 = arith.constant 0 : i32
    %c0_i32_0 = arith.constant 0 : i32
    %c0_i32_1 = arith.constant 0 : i32
    return %c0_i32, %c0_i32_0 : i32, i32
  }
  func.func @transform_6(%arg0: i32) -> (i32, i32) {
    %c0_i32 = arith.constant 0 : i32
    %c0_i32_0 = arith.constant 0 : i32
    %c0_i32_1 = arith.constant 0 : i32
    return %c0_i32, %c0_i32_0 : i32, i32
  }
  func.func @transform_7(%arg0: i32) -> (i32, i32) {
    %c0_i32 = arith.constant 0 : i32
    %c0_i32_0 = arith.constant 0 : i32
    %c0_i32_1 = arith.constant 0 : i32
    return %c0_i32, %c0_i32_0 : i32, i32
  }
  func.func @transform_8(%arg0: i32) -> (i32, i32) {
    %c0_i32 = arith.constant 0 : i32
    %c0_i32_0 = arith.constant 0 : i32
    %c0_i32_1 = arith.constant 0 : i32
    return %c0_i32, %c0_i32_0 : i32, i32
  }
  func.func @transform_9(%arg0: i32) -> (i32, i32) {
    %c0_i32 = arith.constant 0 : i32
    %c0_i32_0 = arith.constant 0 : i32
    %c0_i32_1 = arith.constant 0 : i32
    return %c0_i32, %c0_i32_0 : i32, i32
  }
  func.func @transform_10(%arg0: i32) -> (i32, i32) {
    %c0_i32 = arith.constant 0 : i32
    %c0_i32_0 = arith.constant 0 : i32
    %c0_i32_1 = arith.constant 0 : i32
    return %c0_i32, %c0_i32_0 : i32, i32
  }
  func.func @transform_11(%arg0: i32) -> (i32, i32) {
    %c0_i32 = arith.constant 0 : i32
    %c0_i32_0 = arith.constant 0 : i32
    %c0_i32_1 = arith.constant 0 : i32
    return %c0_i32, %c0_i32_0 : i32, i32
  }
  func.func @transform_12(%arg0: i32) -> (i32, i32, i32) {
    %c0_i32 = arith.constant 0 : i32
    %c0_i32_0 = arith.constant 0 : i32
    %c0_i32_1 = arith.constant 0 : i32
    return %arg0, %c0_i32, %c0_i32_0 : i32, i32, i32
  }
  func.func @transform_13(%arg0: i32) -> (i32, i32, i32) {
    %c0_i32 = arith.constant 0 : i32
    %c0_i32_0 = arith.constant 0 : i32
    %c0_i32_1 = arith.constant 0 : i32
    return %arg0, %c0_i32, %c0_i32_0 : i32, i32, i32
  }
}

</mosaic_0001>

<llo_original>
// kernel: tpu_custom_call.1
$region0: #{tpu_custom_call.1}
  #allocation0 [shape = 'u32[]', space=smem, size = 0x4, offset = 0x4, fixed_abs, tag = 'smem constant byte address 0x4 - core index']
  #allocation1 [shape = 'u32[144,128]{1,0:T(1,128)}', space=vmem, size = 0x12000, scoped, tag = 'internal scratch']
  %s0 = inlined_call_operand.hbm [shape: f32[2,16,128], index: 0, kind: input, shape index: {}]
  %s1 = inlined_call_operand.vmem [shape: f32[1,128], index: 1, kind: input, shape index: {}]
  %s2 = inlined_call_operand.hbm [shape: f32[1,128], index: 2, kind: input, shape index: {}]
  %s3 = inlined_call_operand.hbm [shape: bf16[128,384], index: 3, kind: input, shape index: {}]
  %s4 = inlined_call_operand.hbm [shape: bf16[128,128], index: 4, kind: input, shape index: {}]
  %s5 = inlined_call_operand.vmem [shape: f32[1,128], index: 5, kind: input, shape index: {}]
  %s6 = inlined_call_operand.vmem [shape: f32[1,128], index: 6, kind: input, shape index: {}]
  %s7 = inlined_call_operand.vmem [shape: f32[1,128], index: 7, kind: input, shape index: {}]
  %s8 = inlined_call_operand.hbm [shape: bf16[128,256], index: 8, kind: input, shape index: {}]
  %s9 = inlined_call_operand.vmem [shape: f32[1,256], index: 9, kind: input, shape index: {}]
  %s10 = inlined_call_operand.hbm [shape: bf16[256,128], index: 10, kind: input, shape index: {}]
  %s11 = inlined_call_operand.vmem [shape: f32[1,128], index: 11, kind: input, shape index: {}]
  %s12 = inlined_call_operand.hbm [shape: f32[2,16,128], index: 12, kind: output, shape index: {0}]
  %s13 = inlined_call_operand.hbm [shape: f32[2,16,128], index: 13, kind: output, shape index: {1}]
  %14 = xla_tuple %s12, %s13
  %s15 = sld [smem:[#allocation0]]
  $region113: #{tpu_custom_call.1} parent=0
    _
  %s17 = ssub.s32 1, %s15
  %s18 = scalar_select 0, %s17, %s15
  $region1: #{tpu_custom_call.1} parent=0
    #allocation2 [shape = 'u8[16384]{0}', space=vmem, size = 0x4000, scoped, tag = 'input window, operand 0']
    #allocation3 [shape = 's32[2]{0}', space=sflag, size = 0x8, scoped, tag = 'scoped memory for tpu_custom_call.1']
    #allocation4 [shape = 's32[2]{0}', space=sflag, size = 0x8, scoped, tag = 'scoped memory for tpu_custom_call.1']
    #allocation5 [shape = 'u8[512]{0}', space=vmem, size = 0x400, scoped, tag = 'input window, operand 2, single buffered']
    #allocation6 [shape = 's32[1]{0}', space=sflag, size = 0x4, scoped, tag = 'scoped memory for tpu_custom_call.1']
    #allocation7 [shape = 'u8[98304]{0}', space=vmem, size = 0x18000, scoped, tag = 'input window, operand 3, single buffered']
    #allocation8 [shape = 'u8[32768]{0}', space=vmem, size = 0x8000, scoped, tag = 'input window, operand 4, single buffered']
    #allocation9 [shape = 's32[1]{0}', space=sflag, size = 0x4, scoped, tag = 'scoped memory for tpu_custom_call.1']
    #allocation10 [shape = 'u8[65536]{0}', space=vmem, size = 0x10000, scoped, tag = 'input window, operand 8, single buffered']
    #allocation11 [shape = 'u8[65536]{0}', space=vmem, size = 0x10000, scoped, tag = 'input window, operand 10, single buffered']
    #allocation12 [shape = 's32[1]{0}', space=sflag, size = 0x4, scoped, tag = 'scoped memory for tpu_custom_call.1']
    #allocation13 [shape = 'u8[16384]{0}', space=vmem, size = 0x4000, scoped, tag = 'output window, operand 0']
    #allocation14 [shape = 'u8[16384]{0}', space=vmem, size = 0x4000, scoped, tag = 'output window, operand 1']
    #allocation15 [shape = 's32[2]{0}', space=sflag, size = 0x8, scoped, tag = 'scoped memory for tpu_custom_call.1']
    %19 = vsyncpa [#allocation3], 0
    %s20 = scalar_lea.sflag [#allocation3], 1
    %21 = vsyncpa %s20, 0
    %22 = vsyncpa [#allocation6], 0
    %23 = vsyncpa [#allocation9], 0
    %24 = vsyncpa [#allocation12], 0
    %25 = vsyncpa [#allocation4], 0
    %s26 = scalar_lea.sflag [#allocation4], 1
    %27 = vsyncpa %s26, 0
    %28 = vsyncpa [#allocation15], 0
    %s29 = scalar_lea.sflag [#allocation15], 1
    %30 = vsyncpa %s29, 0
    loop: start=0, step=1, limit=4
    $region2: #{tpu_custom_call.1} parent=1 // loop_pre_header
      _
    $region3: #{tpu_custom_call.1} parent=1 // loop_header
      %s32 = sphi 0, %s36
      %p33 = scmp.ge.s32.totalorder %s32, 4
      %s42 = sphi 0, %s44
      %s45 = sphi 0, %s42
      %s46 = sphi 0, %s45
      %s62 = sphi 0, %s46
      %s66 = sphi 0, %s66
      %s68 = sphi 0, %s66
      %s69 = sphi 0, %s68
      %s83 = sphi 0, %s69
      %s87 = sphi 0, %s87
      %s89 = sphi 0, %s87
      %s90 = sphi 0, %s89
      %s104 = sphi 0, %s90
      %s108 = sphi 0, %s108
      %s110 = sphi 0, %s108
      %s111 = sphi 0, %s110
      %s125 = sphi 0, %s111
      %s129 = sphi 0, %s129
      %s131 = sphi 0, %s129
      %s132 = sphi 0, %s131
      %s146 = sphi 0, %s132
      %s150 = sphi 0, %s150
      %s152 = sphi 0, %s150
      %s153 = sphi 0, %s152
      %s167 = sphi 0, %s153
      %s171 = sphi 0, %s171
      %s173 = sphi 0, %s171
      %s174 = sphi 0, %s173
      %s188 = sphi 0, %s174
      %s192 = sphi 0, %s192
      %s194 = sphi 0, %s192
      %s195 = sphi 0, %s194
      %s209 = sphi 0, %s195
      %s213 = sphi 0, %s213
      %s215 = sphi 0, %s213
      %s216 = sphi 0, %s215
      %s230 = sphi 0, %s216
      %s234 = sphi 0, %s234
      %s236 = sphi 0, %s234
      %s237 = sphi 0, %s236
      %s251 = sphi 0, %s237
      %s255 = sphi 0, %s255
      %s257 = sphi 0, %s255
      %s258 = sphi 0, %s257
      %s272 = sphi 0, %s258
      %s276 = sphi 0, %s276
      %s278 = sphi 0, %s276
      %s279 = sphi 0, %s278
      %s293 = sphi 0, %s279
      %s299 = sphi 0, %s301
      %s302 = sphi 0, %s299
      %s303 = sphi 0, %s302
      %s319 = sphi 0, %s303
      %s325 = sphi 0, %s327
      %s328 = sphi 0, %s325
      %s329 = sphi 0, %s328
      %s345 = sphi 0, %s329
    $region4: #{tpu_custom_call.1} parent=1 // loop_header_branch
      %35 = sbr.rel (%p33) target = $region8
    $region5: #{tpu_custom_call.1} parent=1 // loop_body
      %s37 = ssub.s32 %s32, 1
      %s38 = ssub.s32 %s32, 2
      %s39 = sadd.s32 %s32, 1
      %s40 = ssub.s32 %s32, %s39
      %p41 = scmp.eq.s32.totalorder %s40, 0
      %s43 = sadd.s32 %s42, 1
      %s44 = scalar_select %p41, %s42, %s43
      %p47 = pneg %p41
      %p48 = scmp.eq.s32.totalorder %s32, 1
      %p49 = por %p47, %p48
      %p50 = scmp.ne.s32.totalorder %s42, %s45
      %p51 = scmp.eq.s32.totalorder %s32, 0
      %p52 = por %p50, %p51
      %p53 = scmp.ne.s32.totalorder %s42, %s45
      %p54 = scmp.eq.s32.totalorder %s37, 1
      %p55 = por %p53, %p54
      %p56 = scmp.ne.s32.totalorder %s45, %s46
      %p57 = scmp.eq.s32.totalorder %s37, 0
      %p58 = por %p56, %p57
      %p59 = scmp.ne.s32.totalorder %s45, %s46
      %p60 = scmp.eq.s32.totalorder %s38, 1
      %p61 = por %p59, %p60
      %p63 = scmp.ne.s32.totalorder %s46, %s62
      %p64 = scmp.eq.s32.totalorder %s38, 0
      %p65 = por %p63, %p64
      %s67 = sadd.s32 %s66, 1
      %p70 = scmp.eq.s32.totalorder %s32, 1
      %p71 = scmp.ne.s32.totalorder %s66, %s68
      %p72 = scmp.eq.s32.totalorder %s32, 0
      %p73 = por %p71, %p72
      %p74 = scmp.ne.s32.totalorder %s66, %s68
      %p75 = scmp.eq.s32.totalorder %s37, 1
      %p76 = por %p74, %p75
      %p77 = scmp.ne.s32.totalorder %s68, %s69
      %p78 = scmp.eq.s32.totalorder %s37, 0
      %p79 = por %p77, %p78
      %p80 = scmp.ne.s32.totalorder %s68, %s69
      %p81 = scmp.eq.s32.totalorder %s38, 1
      %p82 = por %p80, %p81
      %p84 = scmp.ne.s32.totalorder %s69, %s83
      %p85 = scmp.eq.s32.totalorder %s38, 0
      %p86 = por %p84, %p85
      %s88 = sadd.s32 %s87, 1
      %p91 = scmp.eq.s32.totalorder %s32, 1
      %p92 = scmp.ne.s32.totalorder %s87, %s89
      %p93 = scmp.eq.s32.totalorder %s32, 0
      %p94 = por %p92, %p93
      %p95 = scmp.ne.s32.totalorder %s87, %s89
      %p96 = scmp.eq.s32.totalorder %s37, 1
      %p97 = por %p95, %p96
      %p98 = scmp.ne.s32.totalorder %s89, %s90
      %p99 = scmp.eq.s32.totalorder %s37, 0
      %p100 = por %p98, %p99
      %p101 = scmp.ne.s32.totalorder %s89, %s90
      %p102 = scmp.eq.s32.totalorder %s38, 1
      %p103 = por %p101, %p102
      %p105 = scmp.ne.s32.totalorder %s90, %s104
      %p106 = scmp.eq.s32.totalorder %s38, 0
      %p107 = por %p105, %p106
      %s109 = sadd.s32 %s108, 1
      %p112 = scmp.eq.s32.totalorder %s32, 1
      %p113 = scmp.ne.s32.totalorder %s108, %s110
      %p114 = scmp.eq.s32.totalorder %s32, 0
      %p115 = por %p113, %p114
      %p116 = scmp.ne.s32.totalorder %s108, %s110
      %p117 = scmp.eq.s32.totalorder %s37, 1
      %p118 = por %p116, %p117
      %p119 = scmp.ne.s32.totalorder %s110, %s111
      %p120 = scmp.eq.s32.totalorder %s37, 0
      %p121 = por %p119, %p120
      %p122 = scmp.ne.s32.totalorder %s110, %s111
      %p123 = scmp.eq.s32.totalorder %s38, 1
      %p124 = por %p122, %p123
      %p126 = scmp.ne.s32.totalorder %s111, %s125
      %p127 = scmp.eq.s32.totalorder %s38, 0
      %p128 = por %p126, %p127
      %s130 = sadd.s32 %s129, 1
      %p133 = scmp.eq.s32.totalorder %s32, 1
      %p134 = scmp.ne.s32.totalorder %s129, %s131
      %p135 = scmp.eq.s32.totalorder %s32, 0
      %p136 = por %p134, %p135
      %p137 = scmp.ne.s32.totalorder %s129, %s131
      %p138 = scmp.eq.s32.totalorder %s37, 1
      %p139 = por %p137, %p138
      %p140 = scmp.ne.s32.totalorder %s131, %s132
      %p141 = scmp.eq.s32.totalorder %s37, 0
      %p142 = por %p140, %p141
      %p143 = scmp.ne.s32.totalorder %s131, %s132
      %p144 = scmp.eq.s32.totalorder %s38, 1
      %p145 = por %p143, %p144
      %p147 = scmp.ne.s32.totalorder %s132, %s146
      %p148 = scmp.eq.s32.totalorder %s38, 0
      %p149 = por %p147, %p148
      %s151 = sadd.s32 %s150, 1
      %p154 = scmp.eq.s32.totalorder %s32, 1
      %p155 = scmp.ne.s32.totalorder %s150, %s152
      %p156 = scmp.eq.s32.totalorder %s32, 0
      %p157 = por %p155, %p156
      %p158 = scmp.ne.s32.totalorder %s150, %s152
      %p159 = scmp.eq.s32.totalorder %s37, 1
      %p160 = por %p158, %p159
      %p161 = scmp.ne.s32.totalorder %s152, %s153
      %p162 = scmp.eq.s32.totalorder %s37, 0
      %p163 = por %p161, %p162
      %p164 = scmp.ne.s32.totalorder %s152, %s153
      %p165 = scmp.eq.s32.totalorder %s38, 1
      %p166 = por %p164, %p165
      %p168 = scmp.ne.s32.totalorder %s153, %s167
      %p169 = scmp.eq.s32.totalorder %s38, 0
      %p170 = por %p168, %p169
      %s172 = sadd.s32 %s171, 1
      %p175 = scmp.eq.s32.totalorder %s32, 1
      %p176 = scmp.ne.s32.totalorder %s171, %s173
      %p177 = scmp.eq.s32.totalorder %s32, 0
      %p178 = por %p176, %p177
      %p179 = scmp.ne.s32.totalorder %s171, %s173
      %p180 = scmp.eq.s32.totalorder %s37, 1
      %p181 = por %p179, %p180
      %p182 = scmp.ne.s32.totalorder %s173, %s174
      %p183 = scmp.eq.s32.totalorder %s37, 0
      %p184 = por %p182, %p183
      %p185 = scmp.ne.s32.totalorder %s173, %s174
      %p186 = scmp.eq.s32.totalorder %s38, 1
      %p187 = por %p185, %p186
      %p189 = scmp.ne.s32.totalorder %s174, %s188
      %p190 = scmp.eq.s32.totalorder %s38, 0
      %p191 = por %p189, %p190
      %s193 = sadd.s32 %s192, 1
      %p196 = scmp.eq.s32.totalorder %s32, 1
      %p197 = scmp.ne.s32.totalorder %s192, %s194
      %p198 = scmp.eq.s32.totalorder %s32, 0
      %p199 = por %p197, %p198
      %p200 = scmp.ne.s32.totalorder %s192, %s194
      %p201 = scmp.eq.s32.totalorder %s37, 1
      %p202 = por %p200, %p201
      %p203 = scmp.ne.s32.totalorder %s194, %s195
      %p204 = scmp.eq.s32.totalorder %s37, 0
      %p205 = por %p203, %p204
      %p206 = scmp.ne.s32.totalorder %s194, %s195
      %p207 = scmp.eq.s32.totalorder %s38, 1
      %p208 = por %p206, %p207
      %p210 = scmp.ne.s32.totalorder %s195, %s209
      %p211 = scmp.eq.s32.totalorder %s38, 0
      %p212 = por %p210, %p211
      %s214 = sadd.s32 %s213, 1
      %p217 = scmp.eq.s32.totalorder %s32, 1
      %p218 = scmp.ne.s32.totalorder %s213, %s215
      %p219 = scmp.eq.s32.totalorder %s32, 0
      %p220 = por %p218, %p219
      %p221 = scmp.ne.s32.totalorder %s213, %s215
      %p222 = scmp.eq.s32.totalorder %s37, 1
      %p223 = por %p221, %p222
      %p224 = scmp.ne.s32.totalorder %s215, %s216
      %p225 = scmp.eq.s32.totalorder %s37, 0
      %p226 = por %p224, %p225
      %p227 = scmp.ne.s32.totalorder %s215, %s216
      %p228 = scmp.eq.s32.totalorder %s38, 1
      %p229 = por %p227, %p228
      %p231 = scmp.ne.s32.totalorder %s216, %s230
      %p232 = scmp.eq.s32.totalorder %s38, 0
      %p233 = por %p231, %p232
      %s235 = sadd.s32 %s234, 1
      %p238 = scmp.eq.s32.totalorder %s32, 1
      %p239 = scmp.ne.s32.totalorder %s234, %s236
      %p240 = scmp.eq.s32.totalorder %s32, 0
      %p241 = por %p239, %p240
      %p242 = scmp.ne.s32.totalorder %s234, %s236
      %p243 = scmp.eq.s32.totalorder %s37, 1
      %p244 = por %p242, %p243
      %p245 = scmp.ne.s32.totalorder %s236, %s237
      %p246 = scmp.eq.s32.totalorder %s37, 0
      %p247 = por %p245, %p246
      %p248 = scmp.ne.s32.totalorder %s236, %s237
      %p249 = scmp.eq.s32.totalorder %s38, 1
      %p250 = por %p248, %p249
      %p252 = scmp.ne.s32.totalorder %s237, %s251
      %p253 = scmp.eq.s32.totalorder %s38, 0
      %p254 = por %p252, %p253
      %s256 = sadd.s32 %s255, 1
      %p259 = scmp.eq.s32.totalorder %s32, 1
      %p260 = scmp.ne.s32.totalorder %s255, %s257
      %p261 = scmp.eq.s32.totalorder %s32, 0
      %p262 = por %p260, %p261
      %p263 = scmp.ne.s32.totalorder %s255, %s257
      %p264 = scmp.eq.s32.totalorder %s37, 1
      %p265 = por %p263, %p264
      %p266 = scmp.ne.s32.totalorder %s257, %s258
      %p267 = scmp.eq.s32.totalorder %s37, 0
      %p268 = por %p266, %p267
      %p269 = scmp.ne.s32.totalorder %s257, %s258
      %p270 = scmp.eq.s32.totalorder %s38, 1
      %p271 = por %p269, %p270
      %p273 = scmp.ne.s32.totalorder %s258, %s272
      %p274 = scmp.eq.s32.totalorder %s38, 0
      %p275 = por %p273, %p274
      %s277 = sadd.s32 %s276, 1
      %p280 = scmp.eq.s32.totalorder %s32, 1
      %p281 = scmp.ne.s32.totalorder %s276, %s278
      %p282 = scmp.eq.s32.totalorder %s32, 0
      %p283 = por %p281, %p282
      %p284 = scmp.ne.s32.totalorder %s276, %s278
      %p285 = scmp.eq.s32.totalorder %s37, 1
      %p286 = por %p284, %p285
      %p287 = scmp.ne.s32.totalorder %s278, %s279
      %p288 = scmp.eq.s32.totalorder %s37, 0
      %p289 = por %p287, %p288
      %p290 = scmp.ne.s32.totalorder %s278, %s279
      %p291 = scmp.eq.s32.totalorder %s38, 1
      %p292 = por %p290, %p291
      %p294 = scmp.ne.s32.totalorder %s279, %s293
      %p295 = scmp.eq.s32.totalorder %s38, 0
      %p296 = por %p294, %p295
      %s297 = ssub.s32 %s32, %s39
      %p298 = scmp.eq.s32.totalorder %s297, 0
      %s300 = sadd.s32 %s299, 1
      %s301 = scalar_select %p298, %s299, %s300
      %p304 = pneg %p298
      %p305 = scmp.eq.s32.totalorder %s32, 1
      %p306 = por %p304, %p305
      %p307 = scmp.ne.s32.totalorder %s299, %s302
      %p308 = scmp.eq.s32.totalorder %s32, 0
      %p309 = por %p307, %p308
      %p310 = scmp.ne.s32.totalorder %s299, %s302
      %p311 = scmp.eq.s32.totalorder %s37, 1
      %p312 = por %p310, %p311
      %p313 = scmp.ne.s32.totalorder %s302, %s303
      %p314 = scmp.eq.s32.totalorder %s37, 0
      %p315 = por %p313, %p314
      %p316 = scmp.ne.s32.totalorder %s302, %s303
      %p317 = scmp.eq.s32.totalorder %s38, 1
      %p318 = por %p316, %p317
      %p320 = scmp.ne.s32.totalorder %s303, %s319
      %p321 = scmp.eq.s32.totalorder %s38, 0
      %p322 = por %p320, %p321
      %s323 = ssub.s32 %s32, %s39
      %p324 = scmp.eq.s32.totalorder %s323, 0
      %s326 = sadd.s32 %s325, 1
      %s327 = scalar_select %p324, %s325, %s326
      %p330 = pneg %p324
      %p331 = scmp.eq.s32.totalorder %s32, 1
      %p332 = por %p330, %p331
      %p333 = scmp.ne.s32.totalorder %s325, %s328
      %p334 = scmp.eq.s32.totalorder %s32, 0
      %p335 = por %p333, %p334
      %p336 = scmp.ne.s32.totalorder %s325, %s328
      %p337 = scmp.eq.s32.totalorder %s37, 1
      %p338 = por %p336, %p337
      %p339 = scmp.ne.s32.totalorder %s328, %s329
      %p340 = scmp.eq.s32.totalorder %s37, 0
      %p341 = por %p339, %p340
      %p342 = scmp.ne.s32.totalorder %s328, %s329
      %p343 = scmp.eq.s32.totalorder %s38, 1
      %p344 = por %p342, %p343
      %p346 = scmp.ne.s32.totalorder %s329, %s345
      %p347 = scmp.eq.s32.totalorder %s38, 0
      %p348 = por %p346, %p347
      %p349 = scmp.le.s32.totalorder 1, %s32
      %p350 = scmp.lt.s32.totalorder %s32, 3
      %p351 = pnand %p349, %p350
      %p352 = pneg %p351
      // Predicated region
      $region9: #{tpu_custom_call.1} parent=5 // pred_check
        _
      $region10: #{tpu_custom_call.1} parent=5 // pred_check_branch
        %354 = sbr.rel (%p351) target = $region12
      $region11: #{tpu_custom_call.1} parent=5 // pred_region
        %s355 = ssub.s32 %s32, 1
        // Predicated region
        $region13: #{tpu_custom_call.1} parent=11 // pred_check
          %p356 = pneg %p79
        $region14: #{tpu_custom_call.1} parent=11 // pred_check_branch
          %358 = sbr.rel (%p356) target = $region16
        $region15: #{tpu_custom_call.1} parent=11 // pred_region
          _
        $region16: #{tpu_custom_call.1} parent=11 // pred_fallthru
          _
        // Predicated region
        $region17: #{tpu_custom_call.1} parent=11 // pred_check
          %p359 = pneg %p100
        $region18: #{tpu_custom_call.1} parent=11 // pred_check_branch
          %361 = sbr.rel (%p359) target = $region20
        $region19: #{tpu_custom_call.1} parent=11 // pred_region
          %s363 = ssub.s32 16, 16
          %364 = vsyncadd [#allocation6], %s363
          %s366 = sshll.u32 [#allocation5], 4
          %s367 = int_to_ptr.vmem [resolvable:$true] %s366
          %369 = dma.hbm_to_vmem [thread:$0]  %s2, 16, %s367, [#allocation6]
        $region20: #{tpu_custom_call.1} parent=11 // pred_fallthru
          _
        // Predicated region
        $region21: #{tpu_custom_call.1} parent=11 // pred_check
          %p370 = pneg %p121
        $region22: #{tpu_custom_call.1} parent=11 // pred_check_branch
          %372 = sbr.rel (%p370) target = $region24
        $region23: #{tpu_custom_call.1} parent=11 // pred_region
          %s374 = ssub.s32 3072, 3072
          %375 = vsyncadd [#allocation6], %s374
          %s376 = sshll.u32 [#allocation7], 4
          %s377 = int_to_ptr.vmem [resolvable:$true] %s376
          %382 = dma.hbm_to_vmem [thread:$0]  %s3, 3072, %s377, [#allocation6], 192, 192, 12
        $region24: #{tpu_custom_call.1} parent=11 // pred_fallthru
          _
        // Predicated region
        $region25: #{tpu_custom_call.1} parent=11 // pred_check
          %p383 = pneg %p142
        $region26: #{tpu_custom_call.1} parent=11 // pred_check_branch
          %385 = sbr.rel (%p383) target = $region28
        $region27: #{tpu_custom_call.1} parent=11 // pred_region
          %s387 = ssub.s32 1024, 1024
          %388 = vsyncadd [#allocation9], %s387
          %s389 = sshll.u32 [#allocation8], 4
          %s390 = int_to_ptr.vmem [resolvable:$true] %s389
          %395 = dma.hbm_to_vmem [thread:$0]  %s4, 1024, %s390, [#allocation9], 64, 64, 4
        $region28: #{tpu_custom_call.1} parent=11 // pred_fallthru
          _
        // Predicated region
        $region29: #{tpu_custom_call.1} parent=11 // pred_check
          %p396 = pneg %p163
        $region30: #{tpu_custom_call.1} parent=11 // pred_check_branch
          %398 = sbr.rel (%p396) target = $region32
        $region31: #{tpu_custom_call.1} parent=11 // pred_region
          _
        $region32: #{tpu_custom_call.1} parent=11 // pred_fallthru
          _
        // Predicated region
        $region33: #{tpu_custom_call.1} parent=11 // pred_check
          %p399 = pneg %p184
        $region34: #{tpu_custom_call.1} parent=11 // pred_check_branch
          %401 = sbr.rel (%p399) target = $region36
        $region35: #{tpu_custom_call.1} parent=11 // pred_region
          _
        $region36: #{tpu_custom_call.1} parent=11 // pred_fallthru
          _
        // Predicated region
        $region37: #{tpu_custom_call.1} parent=11 // pred_check
          %p402 = pneg %p205
        $region38: #{tpu_custom_call.1} parent=11 // pred_check_branch
          %404 = sbr.rel (%p402) target = $region40
        $region39: #{tpu_custom_call.1} parent=11 // pred_region
          _
        $region40: #{tpu_custom_call.1} parent=11 // pred_fallthru
          _
        // Predicated region
        $region41: #{tpu_custom_call.1} parent=11 // pred_check
          %p405 = pneg %p226
        $region42: #{tpu_custom_call.1} parent=11 // pred_check_branch
          %407 = sbr.rel (%p405) target = $region44
        $region43: #{tpu_custom_call.1} parent=11 // pred_region
          %s409 = ssub.s32 2048, 2048
          %410 = vsyncadd [#allocation9], %s409
          %s411 = sshll.u32 [#allocation10], 4
          %s412 = int_to_ptr.vmem [resolvable:$true] %s411
          %417 = dma.hbm_to_vmem [thread:$0]  %s8, 2048, %s412, [#allocation9], 128, 128, 8
        $region44: #{tpu_custom_call.1} parent=11 // pred_fallthru
          _
        // Predicated region
        $region45: #{tpu_custom_call.1} parent=11 // pred_check
          %p418 = pneg %p247
        $region46: #{tpu_custom_call.1} parent=11 // pred_check_branch
          %420 = sbr.rel (%p418) target = $region48
        $region47: #{tpu_custom_call.1} parent=11 // pred_region
          _
        $region48: #{tpu_custom_call.1} parent=11 // pred_fallthru
          _
        // Predicated region
        $region49: #{tpu_custom_call.1} parent=11 // pred_check
          %p421 = pneg %p268
        $region50: #{tpu_custom_call.1} parent=11 // pred_check_branch
          %423 = sbr.rel (%p421) target = $region52
        $region51: #{tpu_custom_call.1} parent=11 // pred_region
          %s425 = ssub.s32 2048, 2048
          %426 = vsyncadd [#allocation12], %s425
          %s427 = sshll.u32 [#allocation11], 4
          %s428 = int_to_ptr.vmem [resolvable:$true] %s427
          %433 = dma.hbm_to_vmem [thread:$0]  %s10, 2048, %s428, [#allocation12], 64, 64, 4
        $region52: #{tpu_custom_call.1} parent=11 // pred_fallthru
          _
        // Predicated region
        $region53: #{tpu_custom_call.1} parent=11 // pred_check
          %p434 = pneg %p289
        $region54: #{tpu_custom_call.1} parent=11 // pred_check_branch
          %436 = sbr.rel (%p434) target = $region56
        $region55: #{tpu_custom_call.1} parent=11 // pred_region
          _
        $region56: #{tpu_custom_call.1} parent=11 // pred_fallthru
          _
      $region12: #{tpu_custom_call.1} parent=5 // pred_fallthru
        _
      %p437 = scmp.lt.s32.totalorder %s32, 2
      // Predicated region
      $region57: #{tpu_custom_call.1} parent=5 // pred_check
        %p438 = pneg %p437
      $region58: #{tpu_custom_call.1} parent=5 // pred_check_branch
        %440 = sbr.rel (%p438) target = $region60
      $region59: #{tpu_custom_call.1} parent=5 // pred_region
        // Predicated region
        $region61: #{tpu_custom_call.1} parent=59 // pred_check
          %p441 = pneg %p52
        $region62: #{tpu_custom_call.1} parent=59 // pred_check_branch
          %443 = sbr.rel (%p441) target = $region64
        $region63: #{tpu_custom_call.1} parent=59 // pred_region
          %s444 = sand.u32 %s42, 1
          %s445 = scalar_lea.sflag [#allocation3], %s444
          %s446 = sand.u32 %s42, 1
          %s447 = smul.addr %s446, 16
          %s448 = scalar_lea.vmem [#allocation2], %s447
          %s450 = ssub.s32 256, 256
          %451 = vsyncadd %s445, %s450
          %s452 = smul.addr %s32, 2
          %s453 = smul.addr %s452, 128
          %s454 = scalar_lea.hbm %s0, %s453
          %s455 = sshll.u32 %s448, 4
          %s456 = int_to_ptr.vmem [resolvable:$true] %s455
          %461 = dma.hbm_to_vmem [thread:$0]  %s454, 256, %s456, %s445, 128, 128, 8
        $region64: #{tpu_custom_call.1} parent=59 // pred_fallthru
          _
      $region60: #{tpu_custom_call.1} parent=5 // pred_fallthru
        _
      %p462 = scmp.le.s32.totalorder 1, %s32
      %p463 = scmp.lt.s32.totalorder %s32, 3
      %p464 = pnand %p462, %p463
      %p465 = pneg %p464
      // Predicated region
      $region65: #{tpu_custom_call.1} parent=5 // pred_check
        _
      $region66: #{tpu_custom_call.1} parent=5 // pred_check_branch
        %467 = sbr.rel (%p464) target = $region68
      $region67: #{tpu_custom_call.1} parent=5 // pred_region
        %s468 = ssub.s32 %s32, 1
        %s469 = sand.u32 %s45, 1
        %s470 = scalar_lea.sflag [#allocation3], %s469
        %s471 = sand.u32 %s45, 1
        %s472 = smul.addr %s471, 16
        %s473 = scalar_lea.vmem [#allocation2], %s472
        // Predicated region
        $region69: #{tpu_custom_call.1} parent=67 // pred_check
          %p474 = pneg %p58
        $region70: #{tpu_custom_call.1} parent=67 // pred_check_branch
          %476 = sbr.rel (%p474) target = $region72
        $region71: #{tpu_custom_call.1} parent=67 // pred_region
          %477 = dma.done %s470, 256
        $region72: #{tpu_custom_call.1} parent=67 // pred_fallthru
          _
        // Predicated region
        $region73: #{tpu_custom_call.1} parent=67 // pred_check
          %p478 = pneg %p100
        $region74: #{tpu_custom_call.1} parent=67 // pred_check_branch
          %480 = sbr.rel (%p478) target = $region76
        $region75: #{tpu_custom_call.1} parent=67 // pred_region
          %481 = dma.done [#allocation6], 16
        $region76: #{tpu_custom_call.1} parent=67 // pred_fallthru
          _
        // Predicated region
        $region77: #{tpu_custom_call.1} parent=67 // pred_check
          %p482 = pneg %p121
        $region78: #{tpu_custom_call.1} parent=67 // pred_check_branch
          %484 = sbr.rel (%p482) target = $region80
        $region79: #{tpu_custom_call.1} parent=67 // pred_region
          %485 = dma.done [#allocation6], 3072
        $region80: #{tpu_custom_call.1} parent=67 // pred_fallthru
          _
        // Predicated region
        $region81: #{tpu_custom_call.1} parent=67 // pred_check
          %p486 = pneg %p142
        $region82: #{tpu_custom_call.1} parent=67 // pred_check_branch
          %488 = sbr.rel (%p486) target = $region84
        $region83: #{tpu_custom_call.1} parent=67 // pred_region
          %489 = dma.done [#allocation9], 1024
        $region84: #{tpu_custom_call.1} parent=67 // pred_fallthru
          _
        // Predicated region
        $region85: #{tpu_custom_call.1} parent=67 // pred_check
          %p490 = pneg %p226
        $region86: #{tpu_custom_call.1} parent=67 // pred_check_branch
          %492 = sbr.rel (%p490) target = $region88
        $region87: #{tpu_custom_call.1} parent=67 // pred_region
          %493 = dma.done [#allocation9], 2048
        $region88: #{tpu_custom_call.1} parent=67 // pred_fallthru
          _
        // Predicated region
        $region89: #{tpu_custom_call.1} parent=67 // pred_check
          %p494 = pneg %p268
        $region90: #{tpu_custom_call.1} parent=67 // pred_check_branch
          %496 = sbr.rel (%p494) target = $region92
        $region91: #{tpu_custom_call.1} parent=67 // pred_region
          %497 = dma.done [#allocation12], 2048
        $region92: #{tpu_custom_call.1} parent=67 // pred_fallthru
          _
        %s498 = sand.u32 %s45, 1
        %s499 = scalar_lea.sflag [#allocation3], %s498
        %s500 = sand.u32 %s45, 1
        %s501 = smul.addr %s500, 16
        %s502 = scalar_lea.vmem [#allocation2], %s501
        %p503 = pneg %p58
        %p504 = pneg %p55
        %p505 = pneg %p79
        %p506 = pneg %p76
        %p507 = pneg %p100
        %p508 = pneg %p97
        %p509 = pneg %p121
        %p510 = pneg %p118
        %p511 = pneg %p142
        %p512 = pneg %p139
        %p513 = pneg %p163
        %p514 = pneg %p160
        %p515 = pneg %p184
        %p516 = pneg %p181
        %p517 = pneg %p205
        %p518 = pneg %p202
        %p519 = pneg %p226
        %p520 = pneg %p223
        %p521 = pneg %p247
        %p522 = pneg %p244
        %p523 = pneg %p268
        %p524 = pneg %p265
        %p525 = pneg %p289
        %p526 = pneg %p286
        %p527 = pneg %p315
        %p528 = pneg %p312
        %s529 = sand.u32 %s302, 1
        %s530 = scalar_lea.sflag [#allocation4], %s529
        %s531 = sand.u32 %s302, 1
        %s532 = smul.addr %s531, 16
        %s533 = scalar_lea.vmem [#allocation13], %s532
        %p534 = pneg %p341
        %p535 = pneg %p338
        %s536 = sand.u32 %s328, 1
        %s537 = scalar_lea.sflag [#allocation15], %s536
        %s538 = sand.u32 %s328, 1
        %s539 = smul.addr %s538, 16
        %s540 = scalar_lea.vmem [#allocation14], %s539
        %v542 = vld [vmem:[%s473] sm:$0xff]
        %v543 = vld [vmem:[%s473 + $0x8] sm:$0xff]
        %v544 = vld [vmem:[%s1] sm:$0x1]
        %v545 = vld [vmem:[#allocation5] sm:$0x1]
        %546 = vadd.xlane.f32.xlu0 %v542
        %v547 = vpop.xlane.xlu0 %546
        %548 = vadd.xlane.f32.xlu0 %v543
        %v549 = vpop.xlane.xlu0 %548
        %v550 = vrcp.pop 128.0
        %v551 = vmul.f32 %v547, %v550
        %v552 = vmul.f32 %v549, %v550
        %v553 = vmul.f32 %v542, %v542
        %v554 = vmul.f32 %v543, %v543
        %555 = vadd.xlane.f32.xlu0 %v553
        %v556 = vpop.xlane.xlu0 %555
        %557 = vadd.xlane.f32.xlu0 %v554
        %v558 = vpop.xlane.xlu0 %557
        %v559 = vmul.f32 %v556, %v550
        %v560 = vmul.f32 %v558, %v550
        %v561 = vmul.f32 %v551, %v551
        %v562 = vmul.f32 %v552, %v552
        %v563 = vsub.f32 %v559, %v561
        %v564 = vsub.f32 %v560, %v562
        %v565 = vmax.f32 %v563, 0.0
        %v566 = vmax.f32 %v564, 0.0
        %v567 = vsub.f32 %v542, %v551
        %v568 = vsub.f32 %v543, %v552
        %v569 = vadd.f32 %v565, 1e-05
        %v570 = vadd.f32 %v566, 1e-05
        %v571 = vrsqrt.pop %v569
        %v572 = vrsqrt.pop %v570
        %v573 = vmul.f32 %v567, %v571
        %v574 = vmul.f32 %v568, %v572
        %v576 = vlaneseq
        %v577 = vshrl.u32 %v576, 7
        %v578 = vsub.s32 0, %v577
        %v579 = vrot.slane %v544, %v578
        %v581 = vmul.f32 %v573, %v579
        %v582 = vmul.f32 %v574, %v579
        %v584 = vlaneseq
        %v585 = vshrl.u32 %v584, 7
        %v586 = vsub.s32 0, %v585
        %v587 = vrot.slane %v545, %v586
        %v589 = vadd.f32 %v581, %v587
        %v590 = vadd.f32 %v582, %v587
        %v591 = vpack.c.bf16 %v590, %v589
        %v592 = vld [vmem:[#allocation7] sm:$0xff]
        %v593 = vld [vmem:[#allocation7 + $0x8] sm:$0xf]
        %v594 = vld [vmem:[#allocation7 + $0xc] sm:$0xff]
        %v595 = vld [vmem:[#allocation7 + $0x14] sm:$0xf]
        %v596 = vld [vmem:[#allocation7 + $0x18] sm:$0xff]
        %v597 = vld [vmem:[#allocation7 + $0x20] sm:$0xf]
        %v598 = vld [vmem:[#allocation7 + $0x24] sm:$0xff]
        %v599 = vld [vmem:[#allocation7 + $0x2c] sm:$0xf]
        %v600 = vld [vmem:[#allocation7 + $0x30] sm:$0xff]
        %v601 = vld [vmem:[#allocation7 + $0x38] sm:$0xf]
        %v602 = vld [vmem:[#allocation7 + $0x3c] sm:$0xff]
        %v603 = vld [vmem:[#allocation7 + $0x44] sm:$0xf]
        %v604 = vld [vmem:[#allocation7 + $0x48] sm:$0xff]
        %v605 = vld [vmem:[#allocation7 + $0x50] sm:$0xf]
        %v606 = vld [vmem:[#allocation7 + $0x54] sm:$0xff]
        %v607 = vld [vmem:[#allocation7 + $0x5c] sm:$0xf]
        %v608 = vld [vmem:[#allocation7 + $0x60] sm:$0xff]
        %v609 = vld [vmem:[#allocation7 + $0x68] sm:$0xf]
        %v610 = vld [vmem:[#allocation7 + $0x6c] sm:$0xff]
        %v611 = vld [vmem:[#allocation7 + $0x74] sm:$0xf]
        %v612 = vld [vmem:[#allocation7 + $0x78] sm:$0xff]
        %v613 = vld [vmem:[#allocation7 + $0x80] sm:$0xf]
        %v614 = vld [vmem:[#allocation7 + $0x84] sm:$0xff]
        %v615 = vld [vmem:[#allocation7 + $0x8c] sm:$0xf]
        %v616 = vld [vmem:[#allocation7 + $0x90] sm:$0xff]
        %v617 = vld [vmem:[#allocation7 + $0x98] sm:$0xf]
        %v618 = vld [vmem:[#allocation7 + $0x9c] sm:$0xff]
        %v619 = vld [vmem:[#allocation7 + $0xa4] sm:$0xf]
        %v620 = vld [vmem:[#allocation7 + $0xa8] sm:$0xff]
        %v621 = vld [vmem:[#allocation7 + $0xb0] sm:$0xf]
        %v622 = vld [vmem:[#allocation7 + $0xb4] sm:$0xff]
        %v623 = vld [vmem:[#allocation7 + $0xbc] sm:$0xf]
        %v656 = vunpack.c.l.b16 %v592
        %v657 = vunpack.c.h.b16 %v592
        %v658 = vunpack.c.l.b16 %v593
        %v659 = vunpack.c.l.b16 %v594
        %v660 = vunpack.c.h.b16 %v594
        %v661 = vunpack.c.l.b16 %v595
        %v662 = vunpack.c.l.b16 %v596
        %v663 = vunpack.c.h.b16 %v596
        %v664 = vunpack.c.l.b16 %v597
        %v665 = vunpack.c.l.b16 %v598
        %v666 = vunpack.c.h.b16 %v598
        %v667 = vunpack.c.l.b16 %v599
        %v668 = vunpack.c.l.b16 %v600
        %v669 = vunpack.c.h.b16 %v600
        %v670 = vunpack.c.l.b16 %v601
        %v671 = vunpack.c.l.b16 %v602
        %v672 = vunpack.c.h.b16 %v602
        %v673 = vunpack.c.l.b16 %v603
        %v674 = vunpack.c.l.b16 %v604
        %v675 = vunpack.c.h.b16 %v604
        %v676 = vunpack.c.l.b16 %v605
        %v677 = vunpack.c.l.b16 %v606
        %v678 = vunpack.c.h.b16 %v606
        %v679 = vunpack.c.l.b16 %v607
        %v680 = vunpack.c.l.b16 %v608
        %v681 = vunpack.c.h.b16 %v608
        %v682 = vunpack.c.l.b16 %v609
        %v683 = vunpack.c.l.b16 %v610
        %v684 = vunpack.c.h.b16 %v610
        %v685 = vunpack.c.l.b16 %v611
        %v686 = vunpack.c.l.b16 %v612
        %v687 = vunpack.c.h.b16 %v612
        %v688 = vunpack.c.l.b16 %v613
        %v689 = vunpack.c.l.b16 %v614
        %v690 = vunpack.c.h.b16 %v614
        %v691 = vunpack.c.l.b16 %v615
        %v692 = vunpack.c.l.b16 %v616
        %v693 = vunpack.c.h.b16 %v616
        %v694 = vunpack.c.l.b16 %v617
        %v695 = vunpack.c.l.b16 %v618
        %v696 = vunpack.c.h.b16 %v618
        %v697 = vunpack.c.l.b16 %v619
        %v698 = vunpack.c.l.b16 %v620
        %v699 = vunpack.c.h.b16 %v620
        %v700 = vunpack.c.l.b16 %v621
        %v701 = vunpack.c.l.b16 %v622
        %v702 = vunpack.c.h.b16 %v622
        %v703 = vunpack.c.l.b16 %v623
        %v704 = vpack.c.b16 %v659, %v656
        %v705 = vpack.c.b16 %v660, %v657
        %v706 = vpack.c.b16 %v661, %v658
        %v707 = vpack.c.b16 %v665, %v662
        %v708 = vpack.c.b16 %v666, %v663
        %v709 = vpack.c.b16 %v667, %v664
        %v710 = vpack.c.b16 %v671, %v668
        %v711 = vpack.c.b16 %v672, %v669
        %v712 = vpack.c.b16 %v673, %v670
        %v713 = vpack.c.b16 %v677, %v674
        %v714 = vpack.c.b16 %v678, %v675
        %v715 = vpack.c.b16 %v679, %v676
        %v716 = vpack.c.b16 %v683, %v680
        %v717 = vpack.c.b16 %v684, %v681
        %v718 = vpack.c.b16 %v685, %v682
        %v719 = vpack.c.b16 %v689, %v686
        %v720 = vpack.c.b16 %v690, %v687
        %v721 = vpack.c.b16 %v691, %v688
        %v722 = vpack.c.b16 %v695, %v692
        %v723 = vpack.c.b16 %v696, %v693
        %v724 = vpack.c.b16 %v697, %v694
        %v725 = vpack.c.b16 %v701, %v698
        %v726 = vpack.c.b16 %v702, %v699
        %v727 = vpack.c.b16 %v703, %v700
        %752 = vmatprep.subr.bf16.mxu0 %v726
        %753 = vmatpush1.bf16.msra.mxu0 %v725
        %754 = vmatprep.subr.bf16.mxu0 %v723
        %755 = vmatpush1.bf16.msra.mxu0 %v722
        %756 = vmatprep.subr.bf16.mxu0 %v720
        %757 = vmatpush1.bf16.msra.mxu0 %v719
        %758 = vmatprep.subr.bf16.mxu0 %v717
        %759 = vmatpush1.bf16.msra.mxu0 %v716
        %760 = vmatprep.subr.bf16.mxu0 %v714
        %761 = vmatpush1.bf16.msra.mxu0 %v713
        %762 = vmatprep.subr.bf16.mxu0 %v711
        %763 = vmatpush1.bf16.msra.mxu0 %v710
        %764 = vmatprep.subr.bf16.mxu0 %v708
        %765 = vmatpush1.bf16.msra.mxu0 %v707
        %766 = vmatprep.subr.bf16.mxu0 %v705
        %767 = vmatpush1.bf16.msra.mxu0 %v704
        %768 = vmatprep.subr.bf16.mxu0 0
        %769 = vmatpush2.bf16.msra.mxu0 0
        %770 = vmatprep.subr.bf16.mxu0 0
        %771 = vmatpush2.bf16.msra.mxu0 0
        %772 = vmatprep.subr.bf16.mxu0 0
        %773 = vmatpush2.bf16.msra.mxu0 0
        %774 = vmatprep.subr.bf16.mxu0 0
        %775 = vmatpush2.bf16.msra.mxu0 0
        %776 = vmatprep.subr.bf16.mxu0 0
        %777 = vmatpush2.bf16.msra.mxu0 0
        %778 = vmatprep.subr.bf16.mxu0 0
        %779 = vmatpush2.bf16.msra.mxu0 0
        %780 = vmatprep.subr.bf16.mxu0 0
        %781 = vmatpush2.bf16.msra.mxu0 0
        %782 = vmatprep.subr.bf16.mxu0 0
        %783 = vmatpush2.bf16.msra.mxu0 0
        %784 = vmatprep.mubr.bf16.mxu0 0
        %785 = vmatmul.mubr.bf16.gmra.mxu0 %v591
        %v786 = vpop.f32.mrf.mxu0
        %v787 = vadd.f32 0.0, %v786
        %v788 = vpop.f32.mrf.mxu0
        %v789 = vadd.f32 0.0, %v788
        %v790 = vpop.f32.mrf.mxu0
        %v791 = vadd.f32 0.0, %v790
        %v792 = vpop.f32.mrf.mxu0
        %v793 = vadd.f32 0.0, %v792
        %794 = vdwg.mxu0
        %795 = vmatprep.subr.bf16.mxu0 0
        %796 = vmatpush1.bf16.msra.mxu0 %v727
        %797 = vmatprep.subr.bf16.mxu0 0
        %798 = vmatpush1.bf16.msra.mxu0 %v724
        %799 = vmatprep.subr.bf16.mxu0 0
        %800 = vmatpush1.bf16.msra.mxu0 %v721
        %801 = vmatprep.subr.bf16.mxu0 0
        %802 = vmatpush1.bf16.msra.mxu0 %v718
        %803 = vmatprep.subr.bf16.mxu0 0
        %804 = vmatpush1.bf16.msra.mxu0 %v715
        %805 = vmatprep.subr.bf16.mxu0 0
        %806 = vmatpush1.bf16.msra.mxu0 %v712
        %807 = vmatprep.subr.bf16.mxu0 0
        %808 = vmatpush1.bf16.msra.mxu0 %v709
        %809 = vmatprep.subr.bf16.mxu0 0
        %810 = vmatpush1.bf16.msra.mxu0 %v706
        %811 = vmatprep.subr.bf16.mxu0 0
        %812 = vmatpush2.bf16.msra.mxu0 0
        %813 = vmatprep.subr.bf16.mxu0 0
        %814 = vmatpush2.bf16.msra.mxu0 0
        %815 = vmatprep.subr.bf16.mxu0 0
        %816 = vmatpush2.bf16.msra.mxu0 0
        %817 = vmatprep.subr.bf16.mxu0 0
        %818 = vmatpush2.bf16.msra.mxu0 0
        %819 = vmatprep.subr.bf16.mxu0 0
        %820 = vmatpush2.bf16.msra.mxu0 0
        %821 = vmatprep.subr.bf16.mxu0 0
        %822 = vmatpush2.bf16.msra.mxu0 0
        %823 = vmatprep.subr.bf16.mxu0 0
        %824 = vmatpush2.bf16.msra.mxu0 0
        %825 = vmatprep.subr.bf16.mxu0 0
        %826 = vmatpush2.bf16.msra.mxu0 0
        %827 = vmatprep.mubr.bf16.mxu0 0
        %828 = vmatmul.mubr.bf16.gmra.mxu0 %v591
        %v829 = vpop.f32.mrf.mxu0
        %v830 = vadd.f32 0.0, %v829
        %v831 = vpop.f32.mrf.mxu0
        %v832 = vpop.f32.mrf.mxu0
        %v833 = vadd.f32 0.0, %v832
        %v834 = vpop.f32.mrf.mxu0
        %835 = vdwg.mxu0
        %v836 = vmul.f32 %v787, 0.17677669
        %v837 = vmul.f32 %v791, 0.17677669
        %840 = vrot.lane.b32.xlu0 %v836, 96
        %v841 = vpop.permute.xlu0 %840
        %842 = vrot.lane.b32.xlu0 %v837, 96
        %v843 = vpop.permute.xlu0 %842
        %846 = vrot.lane.b32.xlu0 %v836, 64
        %v847 = vpop.permute.xlu0 %846
        %848 = vrot.lane.b32.xlu0 %v837, 64
        %v849 = vpop.permute.xlu0 %848
        %852 = vrot.lane.b32.xlu0 %v836, 32
        %v853 = vpop.permute.xlu0 %852
        %854 = vrot.lane.b32.xlu0 %v837, 32
        %v855 = vpop.permute.xlu0 %854
        %v858 = vcombine.low %v836, %v847
        %v859 = vcombine.high %v836, %v847
        %v861 = vunpack.c.l.s4 1983009808
        %v862 = vunpack.c.0.s8 %v861
        %v863 = vlaneseq
        %v864 = vshrl.u32 %v863, 7
        %v865 = vsub.s32 %v862, %v864
        %v866 = vrot.slane %v858, %v865
        %v868 = vunpack.c.l.s4 1983009808
        %v869 = vunpack.c.0.s8 %v868
        %v870 = vlaneseq
        %v871 = vshrl.u32 %v870, 7
        %v872 = vsub.s32 %v869, %v871
        %v873 = vrot.slane %v859, %v872
        %v874 = vcombine.low %v841, %v853
        %v875 = vcombine.high %v841, %v853
        %v877 = vunpack.c.l.s4 1983009808
        %v878 = vunpack.c.0.s8 %v877
        %v879 = vlaneseq
        %v880 = vshrl.u32 %v879, 7
        %v881 = vsub.s32 %v878, %v880
        %v882 = vrot.slane %v874, %v881
        %v884 = vunpack.c.l.s4 1983009808
        %v885 = vunpack.c.0.s8 %v884
        %v886 = vlaneseq
        %v887 = vshrl.u32 %v886, 7
        %v888 = vsub.s32 %v885, %v887
        %v889 = vrot.slane %v875, %v888
        %v890 = vcombine.low %v866, %v882
        %v891 = vcombine.high %v866, %v882
        %v893 = vunpack.c.l.s4 1934713408
        %v894 = vunpack.c.0.s8 %v893
        %v895 = vlaneseq
        %v896 = vshrl.u32 %v895, 7
        %v897 = vsub.s32 %v894, %v896
        %v898 = vrot.slane %v890, %v897
        %v900 = vunpack.c.l.s4 1934713408
        %v901 = vunpack.c.0.s8 %v900
        %v902 = vlaneseq
        %v903 = vshrl.u32 %v902, 7
        %v904 = vsub.s32 %v901, %v903
        %v905 = vrot.slane %v891, %v904
        %v906 = vcombine.low %v873, %v889
        %v907 = vcombine.high %v873, %v889
        %v909 = vunpack.c.l.s4 1934713408
        %v910 = vunpack.c.0.s8 %v909
        %v911 = vlaneseq
        %v912 = vshrl.u32 %v911, 7
        %v913 = vsub.s32 %v910, %v912
        %v914 = vrot.slane %v906, %v913
        %v916 = vunpack.c.l.s4 1934713408
        %v917 = vunpack.c.0.s8 %v916
        %v918 = vlaneseq
        %v919 = vshrl.u32 %v918, 7
        %v920 = vsub.s32 %v917, %v919
        %v921 = vrot.slane %v907, %v920
        %v922 = vcombine.high %v898, 0.0
        %v923 = vcombine.high %v905, 0.0
        %v924 = vcombine.high %v914, 0.0
        %v925 = vcombine.high %v921, 0.0
        %v926 = vcombine.low %v837, %v849
        %v927 = vcombine.high %v837, %v849
        %v929 = vunpack.c.l.s4 1983009808
        %v930 = vunpack.c.0.s8 %v929
        %v931 = vlaneseq
        %v932 = vshrl.u32 %v931, 7
        %v933 = vsub.s32 %v930, %v932
        %v934 = vrot.slane %v926, %v933
        %v936 = vunpack.c.l.s4 1983009808
        %v937 = vunpack.c.0.s8 %v936
        %v938 = vlaneseq
        %v939 = vshrl.u32 %v938, 7
        %v940 = vsub.s32 %v937, %v939
        %v941 = vrot.slane %v927, %v940
        %v942 = vcombine.low %v843, %v855
        %v943 = vcombine.high %v843, %v855
        %v945 = vunpack.c.l.s4 1983009808
        %v946 = vunpack.c.0.s8 %v945
        %v947 = vlaneseq
        %v948 = vshrl.u32 %v947, 7
        %v949 = vsub.s32 %v946, %v948
        %v950 = vrot.slane %v942, %v949
        %v952 = vunpack.c.l.s4 1983009808
        %v953 = vunpack.c.0.s8 %v952
        %v954 = vlaneseq
        %v955 = vshrl.u32 %v954, 7
        %v956 = vsub.s32 %v953, %v955
        %v957 = vrot.slane %v943, %v956
        %v958 = vcombine.low %v934, %v950
        %v959 = vcombine.high %v934, %v950
        %v961 = vunpack.c.l.s4 1934713408
        %v962 = vunpack.c.0.s8 %v961
        %v963 = vlaneseq
        %v964 = vshrl.u32 %v963, 7
        %v965 = vsub.s32 %v962, %v964
        %v966 = vrot.slane %v958, %v965
        %v968 = vunpack.c.l.s4 1934713408
        %v969 = vunpack.c.0.s8 %v968
        %v970 = vlaneseq
        %v971 = vshrl.u32 %v970, 7
        %v972 = vsub.s32 %v969, %v971
        %v973 = vrot.slane %v959, %v972
        %v974 = vcombine.low %v941, %v957
        %v975 = vcombine.high %v941, %v957
        %v977 = vunpack.c.l.s4 1934713408
        %v978 = vunpack.c.0.s8 %v977
        %v979 = vlaneseq
        %v980 = vshrl.u32 %v979, 7
        %v981 = vsub.s32 %v978, %v980
        %v982 = vrot.slane %v974, %v981
        %v984 = vunpack.c.l.s4 1934713408
        %v985 = vunpack.c.0.s8 %v984
        %v986 = vlaneseq
        %v987 = vshrl.u32 %v986, 7
        %v988 = vsub.s32 %v985, %v987
        %v989 = vrot.slane %v975, %v988
        %v990 = vcombine.high %v966, 0.0
        %v991 = vcombine.high %v973, 0.0
        %v992 = vcombine.high %v982, 0.0
        %v993 = vcombine.high %v989, 0.0
        %v994 = vcombine.low %v898, %v905
        %v996 = vunpack.c.l.s4 1983009808
        %v997 = vunpack.c.0.s8 %v996
        %v998 = vlaneseq
        %v999 = vshrl.u32 %v998, 7
        %v1000 = vsub.s32 %v997, %v999
        %v1001 = vrot.slane %v994, %v1000
        %v1002 = vcombine.low %v922, %v923
        %v1004 = vunpack.c.l.s4 1983009808
        %v1005 = vunpack.c.0.s8 %v1004
        %v1006 = vlaneseq
        %v1007 = vshrl.u32 %v1006, 7
        %v1008 = vsub.s32 %v1005, %v1007
        %v1009 = vrot.slane %v1002, %v1008
        %v1010 = vcombine.low %v914, %v921
        %v1012 = vunpack.c.l.s4 1983009808
        %v1013 = vunpack.c.0.s8 %v1012
        %v1014 = vlaneseq
        %v1015 = vshrl.u32 %v1014, 7
        %v1016 = vsub.s32 %v1013, %v1015
        %v1017 = vrot.slane %v1010, %v1016
        %v1018 = vcombine.low %v924, %v925
        %v1020 = vunpack.c.l.s4 1983009808
        %v1021 = vunpack.c.0.s8 %v1020
        %v1022 = vlaneseq
        %v1023 = vshrl.u32 %v1022, 7
        %v1024 = vsub.s32 %v1021, %v1023
        %v1025 = vrot.slane %v1018, %v1024
        %v1026 = vcombine.low %v1001, %v1009
        %v1027 = vcombine.high %v1001, %v1009
        %v1029 = vunpack.c.l.s4 1934713408
        %v1030 = vunpack.c.0.s8 %v1029
        %v1031 = vlaneseq
        %v1032 = vshrl.u32 %v1031, 7
        %v1033 = vsub.s32 %v1030, %v1032
        %v1034 = vrot.slane %v1026, %v1033
        %v1036 = vunpack.c.l.s4 1934713408
        %v1037 = vunpack.c.0.s8 %v1036
        %v1038 = vlaneseq
        %v1039 = vshrl.u32 %v1038, 7
        %v1040 = vsub.s32 %v1037, %v1039
        %v1041 = vrot.slane %v1027, %v1040
        %v1042 = vcombine.low %v1017, %v1025
        %v1043 = vcombine.high %v1017, %v1025
        %v1045 = vunpack.c.l.s4 1934713408
        %v1046 = vunpack.c.0.s8 %v1045
        %v1047 = vlaneseq
        %v1048 = vshrl.u32 %v1047, 7
        %v1049 = vsub.s32 %v1046, %v1048
        %v1050 = vrot.slane %v1042, %v1049
        %v1052 = vunpack.c.l.s4 1934713408
        %v1053 = vunpack.c.0.s8 %v1052
        %v1054 = vlaneseq
        %v1055 = vshrl.u32 %v1054, 7
        %v1056 = vsub.s32 %v1053, %v1055
        %v1057 = vrot.slane %v1043, %v1056
        %v1058 = vcombine.low %v1034, %v1050
        %v1059 = vcombine.high %v1034, %v1050
        %v1060 = vcombine.low %v1041, %v1057
        %v1061 = vcombine.high %v1041, %v1057
        %v1062 = vcombine.low %v966, %v973
        %v1064 = vunpack.c.l.s4 1983009808
        %v1065 = vunpack.c.0.s8 %v1064
        %v1066 = vlaneseq
        %v1067 = vshrl.u32 %v1066, 7
        %v1068 = vsub.s32 %v1065, %v1067
        %v1069 = vrot.slane %v1062, %v1068
        %v1070 = vcombine.low %v990, %v991
        %v1072 = vunpack.c.l.s4 1983009808
        %v1073 = vunpack.c.0.s8 %v1072
        %v1074 = vlaneseq
        %v1075 = vshrl.u32 %v1074, 7
        %v1076 = vsub.s32 %v1073, %v1075
        %v1077 = vrot.slane %v1070, %v1076
        %v1078 = vcombine.low %v982, %v989
        %v1080 = vunpack.c.l.s4 1983009808
        %v1081 = vunpack.c.0.s8 %v1080
        %v1082 = vlaneseq
        %v1083 = vshrl.u32 %v1082, 7
        %v1084 = vsub.s32 %v1081, %v1083
        %v1085 = vrot.slane %v1078, %v1084
        %v1086 = vcombine.low %v992, %v993
        %v1088 = vunpack.c.l.s4 1983009808
        %v1089 = vunpack.c.0.s8 %v1088
        %v1090 = vlaneseq
        %v1091 = vshrl.u32 %v1090, 7
        %v1092 = vsub.s32 %v1089, %v1091
        %v1093 = vrot.slane %v1086, %v1092
        %v1094 = vcombine.low %v1069, %v1077
        %v1095 = vcombine.high %v1069, %v1077
        %v1097 = vunpack.c.l.s4 1934713408
        %v1098 = vunpack.c.0.s8 %v1097
        %v1099 = vlaneseq
        %v1100 = vshrl.u32 %v1099, 7
        %v1101 = vsub.s32 %v1098, %v1100
        %v1102 = vrot.slane %v1094, %v1101
        %v1104 = vunpack.c.l.s4 1934713408
        %v1105 = vunpack.c.0.s8 %v1104
        %v1106 = vlaneseq
        %v1107 = vshrl.u32 %v1106, 7
        %v1108 = vsub.s32 %v1105, %v1107
        %v1109 = vrot.slane %v1095, %v1108
        %v1110 = vcombine.low %v1085, %v1093
        %v1111 = vcombine.high %v1085, %v1093
        %v1113 = vunpack.c.l.s4 1934713408
        %v1114 = vunpack.c.0.s8 %v1113
        %v1115 = vlaneseq
        %v1116 = vshrl.u32 %v1115, 7
        %v1117 = vsub.s32 %v1114, %v1116
        %v1118 = vrot.slane %v1110, %v1117
        %v1120 = vunpack.c.l.s4 1934713408
        %v1121 = vunpack.c.0.s8 %v1120
        %v1122 = vlaneseq
        %v1123 = vshrl.u32 %v1122, 7
        %v1124 = vsub.s32 %v1121, %v1123
        %v1125 = vrot.slane %v1111, %v1124
        %v1126 = vcombine.low %v1102, %v1118
        %v1127 = vcombine.high %v1102, %v1118
        %v1128 = vcombine.low %v1109, %v1125
        %v1129 = vcombine.high %v1109, %v1125
        %1132 = vrot.lane.b32.xlu0 %v789, 96
        %v1133 = vpop.permute.xlu0 %1132
        %1134 = vrot.lane.b32.xlu0 %v793, 96
        %v1135 = vpop.permute.xlu0 %1134
        %1138 = vrot.lane.b32.xlu0 %v789, 64
        %v1139 = vpop.permute.xlu0 %1138
        %1140 = vrot.lane.b32.xlu0 %v793, 64
        %v1141 = vpop.permute.xlu0 %1140
        %1144 = vrot.lane.b32.xlu0 %v789, 32
        %v1145 = vpop.permute.xlu0 %1144
        %1146 = vrot.lane.b32.xlu0 %v793, 32
        %v1147 = vpop.permute.xlu0 %1146
        %v1150 = vcombine.low %v789, %v1139
        %v1151 = vcombine.high %v789, %v1139
        %v1153 = vunpack.c.l.s4 1983009808
        %v1154 = vunpack.c.0.s8 %v1153
        %v1155 = vlaneseq
        %v1156 = vshrl.u32 %v1155, 7
        %v1157 = vsub.s32 %v1154, %v1156
        %v1158 = vrot.slane %v1150, %v1157
        %v1160 = vunpack.c.l.s4 1983009808
        %v1161 = vunpack.c.0.s8 %v1160
        %v1162 = vlaneseq
        %v1163 = vshrl.u32 %v1162, 7
        %v1164 = vsub.s32 %v1161, %v1163
        %v1165 = vrot.slane %v1151, %v1164
        %v1166 = vcombine.low %v1133, %v1145
        %v1167 = vcombine.high %v1133, %v1145
        %v1169 = vunpack.c.l.s4 1983009808
        %v1170 = vunpack.c.0.s8 %v1169
        %v1171 = vlaneseq
        %v1172 = vshrl.u32 %v1171, 7
        %v1173 = vsub.s32 %v1170, %v1172
        %v1174 = vrot.slane %v1166, %v1173
        %v1176 = vunpack.c.l.s4 1983009808
        %v1177 = vunpack.c.0.s8 %v1176
        %v1178 = vlaneseq
        %v1179 = vshrl.u32 %v1178, 7
        %v1180 = vsub.s32 %v1177, %v1179
        %v1181 = vrot.slane %v1167, %v1180
        %v1182 = vcombine.low %v1158, %v1174
        %v1183 = vcombine.high %v1158, %v1174
        %v1185 = vunpack.c.l.s4 1934713408
        %v1186 = vunpack.c.0.s8 %v1185
        %v1187 = vlaneseq
        %v1188 = vshrl.u32 %v1187, 7
        %v1189 = vsub.s32 %v1186, %v1188
        %v1190 = vrot.slane %v1182, %v1189
        %v1192 = vunpack.c.l.s4 1934713408
        %v1193 = vunpack.c.0.s8 %v1192
        %v1194 = vlaneseq
        %v1195 = vshrl.u32 %v1194, 7
        %v1196 = vsub.s32 %v1193, %v1195
        %v1197 = vrot.slane %v1183, %v1196
        %v1198 = vcombine.low %v1165, %v1181
        %v1199 = vcombine.high %v1165, %v1181
        %v1201 = vunpack.c.l.s4 1934713408
        %v1202 = vunpack.c.0.s8 %v1201
        %v1203 = vlaneseq
        %v1204 = vshrl.u32 %v1203, 7
        %v1205 = vsub.s32 %v1202, %v1204
        %v1206 = vrot.slane %v1198, %v1205
        %v1208 = vunpack.c.l.s4 1934713408
        %v1209 = vunpack.c.0.s8 %v1208
        %v1210 = vlaneseq
        %v1211 = vshrl.u32 %v1210, 7
        %v1212 = vsub.s32 %v1209, %v1211
        %v1213 = vrot.slane %v1199, %v1212
        %v1214 = vcombine.high %v1190, 0.0
        %v1215 = vcombine.high %v1197, 0.0
        %v1216 = vcombine.high %v1206, 0.0
        %v1217 = vcombine.high %v1213, 0.0
        %v1218 = vcombine.low %v793, %v1141
        %v1219 = vcombine.high %v793, %v1141
        %v1221 = vunpack.c.l.s4 1983009808
        %v1222 = vunpack.c.0.s8 %v1221
        %v1223 = vlaneseq
        %v1224 = vshrl.u32 %v1223, 7
        %v1225 = vsub.s32 %v1222, %v1224
        %v1226 = vrot.slane %v1218, %v1225
        %v1228 = vunpack.c.l.s4 1983009808
        %v1229 = vunpack.c.0.s8 %v1228
        %v1230 = vlaneseq
        %v1231 = vshrl.u32 %v1230, 7
        %v1232 = vsub.s32 %v1229, %v1231
        %v1233 = vrot.slane %v1219, %v1232
        %v1234 = vcombine.low %v1135, %v1147
        %v1235 = vcombine.high %v1135, %v1147
        %v1237 = vunpack.c.l.s4 1983009808
        %v1238 = vunpack.c.0.s8 %v1237
        %v1239 = vlaneseq
        %v1240 = vshrl.u32 %v1239, 7
        %v1241 = vsub.s32 %v1238, %v1240
        %v1242 = vrot.slane %v1234, %v1241
        %v1244 = vunpack.c.l.s4 1983009808
        %v1245 = vunpack.c.0.s8 %v1244
        %v1246 = vlaneseq
        %v1247 = vshrl.u32 %v1246, 7
        %v1248 = vsub.s32 %v1245, %v1247
        %v1249 = vrot.slane %v1235, %v1248
        %v1250 = vcombine.low %v1226, %v1242
        %v1251 = vcombine.high %v1226, %v1242
        %v1253 = vunpack.c.l.s4 1934713408
        %v1254 = vunpack.c.0.s8 %v1253
        %v1255 = vlaneseq
        %v1256 = vshrl.u32 %v1255, 7
        %v1257 = vsub.s32 %v1254, %v1256
        %v1258 = vrot.slane %v1250, %v1257
        %v1260 = vunpack.c.l.s4 1934713408
        %v1261 = vunpack.c.0.s8 %v1260
        %v1262 = vlaneseq
        %v1263 = vshrl.u32 %v1262, 7
        %v1264 = vsub.s32 %v1261, %v1263
        %v1265 = vrot.slane %v1251, %v1264
        %v1266 = vcombine.low %v1233, %v1249
        %v1267 = vcombine.high %v1233, %v1249
        %v1269 = vunpack.c.l.s4 1934713408
        %v1270 = vunpack.c.0.s8 %v1269
        %v1271 = vlaneseq
        %v1272 = vshrl.u32 %v1271, 7
        %v1273 = vsub.s32 %v1270, %v1272
        %v1274 = vrot.slane %v1266, %v1273
        %v1276 = vunpack.c.l.s4 1934713408
        %v1277 = vunpack.c.0.s8 %v1276
        %v1278 = vlaneseq
        %v1279 = vshrl.u32 %v1278, 7
        %v1280 = vsub.s32 %v1277, %v1279
        %v1281 = vrot.slane %v1267, %v1280
        %v1282 = vcombine.high %v1258, 0.0
        %v1283 = vcombine.high %v1265, 0.0
        %v1284 = vcombine.high %v1274, 0.0
        %v1285 = vcombine.high %v1281, 0.0
        %v1286 = vcombine.low %v1190, %v1197
        %v1288 = vunpack.c.l.s4 1983009808
        %v1289 = vunpack.c.0.s8 %v1288
        %v1290 = vlaneseq
        %v1291 = vshrl.u32 %v1290, 7
        %v1292 = vsub.s32 %v1289, %v1291
        %v1293 = vrot.slane %v1286, %v1292
        %v1294 = vcombine.low %v1214, %v1215
        %v1296 = vunpack.c.l.s4 1983009808
        %v1297 = vunpack.c.0.s8 %v1296
        %v1298 = vlaneseq
        %v1299 = vshrl.u32 %v1298, 7
        %v1300 = vsub.s32 %v1297, %v1299
        %v1301 = vrot.slane %v1294, %v1300
        %v1302 = vcombine.low %v1206, %v1213
        %v1304 = vunpack.c.l.s4 1983009808
        %v1305 = vunpack.c.0.s8 %v1304
        %v1306 = vlaneseq
        %v1307 = vshrl.u32 %v1306, 7
        %v1308 = vsub.s32 %v1305, %v1307
        %v1309 = vrot.slane %v1302, %v1308
        %v1310 = vcombine.low %v1216, %v1217
        %v1312 = vunpack.c.l.s4 1983009808
        %v1313 = vunpack.c.0.s8 %v1312
        %v1314 = vlaneseq
        %v1315 = vshrl.u32 %v1314, 7
        %v1316 = vsub.s32 %v1313, %v1315
        %v1317 = vrot.slane %v1310, %v1316
        %v1318 = vcombine.low %v1293, %v1301
        %v1319 = vcombine.high %v1293, %v1301
        %v1321 = vunpack.c.l.s4 1934713408
        %v1322 = vunpack.c.0.s8 %v1321
        %v1323 = vlaneseq
        %v1324 = vshrl.u32 %v1323, 7
        %v1325 = vsub.s32 %v1322, %v1324
        %v1326 = vrot.slane %v1318, %v1325
        %v1328 = vunpack.c.l.s4 1934713408
        %v1329 = vunpack.c.0.s8 %v1328
        %v1330 = vlaneseq
        %v1331 = vshrl.u32 %v1330, 7
        %v1332 = vsub.s32 %v1329, %v1331
        %v1333 = vrot.slane %v1319, %v1332
        %v1334 = vcombine.low %v1309, %v1317
        %v1335 = vcombine.high %v1309, %v1317
        %v1337 = vunpack.c.l.s4 1934713408
        %v1338 = vunpack.c.0.s8 %v1337
        %v1339 = vlaneseq
        %v1340 = vshrl.u32 %v1339, 7
        %v1341 = vsub.s32 %v1338, %v1340
        %v1342 = vrot.slane %v1334, %v1341
        %v1344 = vunpack.c.l.s4 1934713408
        %v1345 = vunpack.c.0.s8 %v1344
        %v1346 = vlaneseq
        %v1347 = vshrl.u32 %v1346, 7
        %v1348 = vsub.s32 %v1345, %v1347
        %v1349 = vrot.slane %v1335, %v1348
        %v1350 = vcombine.low %v1326, %v1342
        %v1351 = vcombine.high %v1326, %v1342
        %v1352 = vcombine.low %v1333, %v1349
        %v1353 = vcombine.high %v1333, %v1349
        %v1354 = vcombine.low %v1258, %v1265
        %v1356 = vunpack.c.l.s4 1983009808
        %v1357 = vunpack.c.0.s8 %v1356
        %v1358 = vlaneseq
        %v1359 = vshrl.u32 %v1358, 7
        %v1360 = vsub.s32 %v1357, %v1359
        %v1361 = vrot.slane %v1354, %v1360
        %v1362 = vcombine.low %v1282, %v1283
        %v1364 = vunpack.c.l.s4 1983009808
        %v1365 = vunpack.c.0.s8 %v1364
        %v1366 = vlaneseq
        %v1367 = vshrl.u32 %v1366, 7
        %v1368 = vsub.s32 %v1365, %v1367
        %v1369 = vrot.slane %v1362, %v1368
        %v1370 = vcombine.low %v1274, %v1281
        %v1372 = vunpack.c.l.s4 1983009808
        %v1373 = vunpack.c.0.s8 %v1372
        %v1374 = vlaneseq
        %v1375 = vshrl.u32 %v1374, 7
        %v1376 = vsub.s32 %v1373, %v1375
        %v1377 = vrot.slane %v1370, %v1376
        %v1378 = vcombine.low %v1284, %v1285
        %v1380 = vunpack.c.l.s4 1983009808
        %v1381 = vunpack.c.0.s8 %v1380
        %v1382 = vlaneseq
        %v1383 = vshrl.u32 %v1382, 7
        %v1384 = vsub.s32 %v1381, %v1383
        %v1385 = vrot.slane %v1378, %v1384
        %v1386 = vcombine.low %v1361, %v1369
        %v1387 = vcombine.high %v1361, %v1369
        %v1389 = vunpack.c.l.s4 1934713408
        %v1390 = vunpack.c.0.s8 %v1389
        %v1391 = vlaneseq
        %v1392 = vshrl.u32 %v1391, 7
        %v1393 = vsub.s32 %v1390, %v1392
        %v1394 = vrot.slane %v1386, %v1393
        %v1396 = vunpack.c.l.s4 1934713408
        %v1397 = vunpack.c.0.s8 %v1396
        %v1398 = vlaneseq
        %v1399 = vshrl.u32 %v1398, 7
        %v1400 = vsub.s32 %v1397, %v1399
        %v1401 = vrot.slane %v1387, %v1400
        %v1402 = vcombine.low %v1377, %v1385
        %v1403 = vcombine.high %v1377, %v1385
        %v1405 = vunpack.c.l.s4 1934713408
        %v1406 = vunpack.c.0.s8 %v1405
        %v1407 = vlaneseq
        %v1408 = vshrl.u32 %v1407, 7
        %v1409 = vsub.s32 %v1406, %v1408
        %v1410 = vrot.slane %v1402, %v1409
        %v1412 = vunpack.c.l.s4 1934713408
        %v1413 = vunpack.c.0.s8 %v1412
        %v1414 = vlaneseq
        %v1415 = vshrl.u32 %v1414, 7
        %v1416 = vsub.s32 %v1413, %v1415
        %v1417 = vrot.slane %v1403, %v1416
        %v1418 = vcombine.low %v1394, %v1410
        %v1419 = vcombine.high %v1394, %v1410
        %v1420 = vcombine.low %v1401, %v1417
        %v1421 = vcombine.high %v1401, %v1417
        %1424 = vrot.lane.b32.xlu0 %v830, 96
        %v1425 = vpop.permute.xlu0 %1424
        %1426 = vrot.lane.b32.xlu0 %v833, 96
        %v1427 = vpop.permute.xlu0 %1426
        %1430 = vrot.lane.b32.xlu0 %v830, 64
        %v1431 = vpop.permute.xlu0 %1430
        %1432 = vrot.lane.b32.xlu0 %v833, 64
        %v1433 = vpop.permute.xlu0 %1432
        %1436 = vrot.lane.b32.xlu0 %v830, 32
        %v1437 = vpop.permute.xlu0 %1436
        %1438 = vrot.lane.b32.xlu0 %v833, 32
        %v1439 = vpop.permute.xlu0 %1438
        %v1442 = vcombine.low %v830, %v1431
        %v1443 = vcombine.high %v830, %v1431
        %v1445 = vunpack.c.l.s4 1983009808
        %v1446 = vunpack.c.0.s8 %v1445
        %v1447 = vlaneseq
        %v1448 = vshrl.u32 %v1447, 7
        %v1449 = vsub.s32 %v1446, %v1448
        %v1450 = vrot.slane %v1442, %v1449
        %v1452 = vunpack.c.l.s4 1983009808
        %v1453 = vunpack.c.0.s8 %v1452
        %v1454 = vlaneseq
        %v1455 = vshrl.u32 %v1454, 7
        %v1456 = vsub.s32 %v1453, %v1455
        %v1457 = vrot.slane %v1443, %v1456
        %v1458 = vcombine.low %v1425, %v1437
        %v1459 = vcombine.high %v1425, %v1437
        %v1461 = vunpack.c.l.s4 1983009808
        %v1462 = vunpack.c.0.s8 %v1461
        %v1463 = vlaneseq
        %v1464 = vshrl.u32 %v1463, 7
        %v1465 = vsub.s32 %v1462, %v1464
        %v1466 = vrot.slane %v1458, %v1465
        %v1468 = vunpack.c.l.s4 1983009808
        %v1469 = vunpack.c.0.s8 %v1468
        %v1470 = vlaneseq
        %v1471 = vshrl.u32 %v1470, 7
        %v1472 = vsub.s32 %v1469, %v1471
        %v1473 = vrot.slane %v1459, %v1472
        %v1474 = vcombine.low %v1450, %v1466
        %v1475 = vcombine.high %v1450, %v1466
        %v1477 = vunpack.c.l.s4 1934713408
        %v1478 = vunpack.c.0.s8 %v1477
        %v1479 = vlaneseq
        %v1480 = vshrl.u32 %v1479, 7
        %v1481 = vsub.s32 %v1478, %v1480
        %v1482 = vrot.slane %v1474, %v1481
        %v1484 = vunpack.c.l.s4 1934713408
        %v1485 = vunpack.c.0.s8 %v1484
        %v1486 = vlaneseq
        %v1487 = vshrl.u32 %v1486, 7
        %v1488 = vsub.s32 %v1485, %v1487
        %v1489 = vrot.slane %v1475, %v1488
        %v1490 = vcombine.low %v1457, %v1473
        %v1491 = vcombine.high %v1457, %v1473
        %v1493 = vunpack.c.l.s4 1934713408
        %v1494 = vunpack.c.0.s8 %v1493
        %v1495 = vlaneseq
        %v1496 = vshrl.u32 %v1495, 7
        %v1497 = vsub.s32 %v1494, %v1496
        %v1498 = vrot.slane %v1490, %v1497
        %v1500 = vunpack.c.l.s4 1934713408
        %v1501 = vunpack.c.0.s8 %v1500
        %v1502 = vlaneseq
        %v1503 = vshrl.u32 %v1502, 7
        %v1504 = vsub.s32 %v1501, %v1503
        %v1505 = vrot.slane %v1491, %v1504
        %v1506 = vcombine.high %v1482, 0.0
        %v1507 = vcombine.high %v1489, 0.0
        %v1508 = vcombine.high %v1498, 0.0
        %v1509 = vcombine.high %v1505, 0.0
        %v1510 = vcombine.low %v833, %v1433
        %v1511 = vcombine.high %v833, %v1433
        %v1513 = vunpack.c.l.s4 1983009808
        %v1514 = vunpack.c.0.s8 %v1513
        %v1515 = vlaneseq
        %v1516 = vshrl.u32 %v1515, 7
        %v1517 = vsub.s32 %v1514, %v1516
        %v1518 = vrot.slane %v1510, %v1517
        %v1520 = vunpack.c.l.s4 1983009808
        %v1521 = vunpack.c.0.s8 %v1520
        %v1522 = vlaneseq
        %v1523 = vshrl.u32 %v1522, 7
        %v1524 = vsub.s32 %v1521, %v1523
        %v1525 = vrot.slane %v1511, %v1524
        %v1526 = vcombine.low %v1427, %v1439
        %v1527 = vcombine.high %v1427, %v1439
        %v1529 = vunpack.c.l.s4 1983009808
        %v1530 = vunpack.c.0.s8 %v1529
        %v1531 = vlaneseq
        %v1532 = vshrl.u32 %v1531, 7
        %v1533 = vsub.s32 %v1530, %v1532
        %v1534 = vrot.slane %v1526, %v1533
        %v1536 = vunpack.c.l.s4 1983009808
        %v1537 = vunpack.c.0.s8 %v1536
        %v1538 = vlaneseq
        %v1539 = vshrl.u32 %v1538, 7
        %v1540 = vsub.s32 %v1537, %v1539
        %v1541 = vrot.slane %v1527, %v1540
        %v1542 = vcombine.low %v1518, %v1534
        %v1543 = vcombine.high %v1518, %v1534
        %v1545 = vunpack.c.l.s4 1934713408
        %v1546 = vunpack.c.0.s8 %v1545
        %v1547 = vlaneseq
        %v1548 = vshrl.u32 %v1547, 7
        %v1549 = vsub.s32 %v1546, %v1548
        %v1550 = vrot.slane %v1542, %v1549
        %v1552 = vunpack.c.l.s4 1934713408
        %v1553 = vunpack.c.0.s8 %v1552
        %v1554 = vlaneseq
        %v1555 = vshrl.u32 %v1554, 7
        %v1556 = vsub.s32 %v1553, %v1555
        %v1557 = vrot.slane %v1543, %v1556
        %v1558 = vcombine.low %v1525, %v1541
        %v1559 = vcombine.high %v1525, %v1541
        %v1561 = vunpack.c.l.s4 1934713408
        %v1562 = vunpack.c.0.s8 %v1561
        %v1563 = vlaneseq
        %v1564 = vshrl.u32 %v1563, 7
        %v1565 = vsub.s32 %v1562, %v1564
        %v1566 = vrot.slane %v1558, %v1565
        %v1568 = vunpack.c.l.s4 1934713408
        %v1569 = vunpack.c.0.s8 %v1568
        %v1570 = vlaneseq
        %v1571 = vshrl.u32 %v1570, 7
        %v1572 = vsub.s32 %v1569, %v1571
        %v1573 = vrot.slane %v1559, %v1572
        %v1574 = vcombine.high %v1550, 0.0
        %v1575 = vcombine.high %v1557, 0.0
        %v1576 = vcombine.high %v1566, 0.0
        %v1577 = vcombine.high %v1573, 0.0
        %v1578 = vcombine.low %v1482, %v1489
        %v1580 = vunpack.c.l.s4 1983009808
        %v1581 = vunpack.c.0.s8 %v1580
        %v1582 = vlaneseq
        %v1583 = vshrl.u32 %v1582, 7
        %v1584 = vsub.s32 %v1581, %v1583
        %v1585 = vrot.slane %v1578, %v1584
        %v1586 = vcombine.low %v1506, %v1507
        %v1588 = vunpack.c.l.s4 1983009808
        %v1589 = vunpack.c.0.s8 %v1588
        %v1590 = vlaneseq
        %v1591 = vshrl.u32 %v1590, 7
        %v1592 = vsub.s32 %v1589, %v1591
        %v1593 = vrot.slane %v1586, %v1592
        %v1594 = vcombine.low %v1498, %v1505
        %v1596 = vunpack.c.l.s4 1983009808
        %v1597 = vunpack.c.0.s8 %v1596
        %v1598 = vlaneseq
        %v1599 = vshrl.u32 %v1598, 7
        %v1600 = vsub.s32 %v1597, %v1599
        %v1601 = vrot.slane %v1594, %v1600
        %v1602 = vcombine.low %v1508, %v1509
        %v1604 = vunpack.c.l.s4 1983009808
        %v1605 = vunpack.c.0.s8 %v1604
        %v1606 = vlaneseq
        %v1607 = vshrl.u32 %v1606, 7
        %v1608 = vsub.s32 %v1605, %v1607
        %v1609 = vrot.slane %v1602, %v1608
        %v1610 = vcombine.low %v1585, %v1593
        %v1611 = vcombine.high %v1585, %v1593
        %v1613 = vunpack.c.l.s4 1934713408
        %v1614 = vunpack.c.0.s8 %v1613
        %v1615 = vlaneseq
        %v1616 = vshrl.u32 %v1615, 7
        %v1617 = vsub.s32 %v1614, %v1616
        %v1618 = vrot.slane %v1610, %v1617
        %v1620 = vunpack.c.l.s4 1934713408
        %v1621 = vunpack.c.0.s8 %v1620
        %v1622 = vlaneseq
        %v1623 = vshrl.u32 %v1622, 7
        %v1624 = vsub.s32 %v1621, %v1623
        %v1625 = vrot.slane %v1611, %v1624
        %v1626 = vcombine.low %v1601, %v1609
        %v1627 = vcombine.high %v1601, %v1609
        %v1629 = vunpack.c.l.s4 1934713408
        %v1630 = vunpack.c.0.s8 %v1629
        %v1631 = vlaneseq
        %v1632 = vshrl.u32 %v1631, 7
        %v1633 = vsub.s32 %v1630, %v1632
        %v1634 = vrot.slane %v1626, %v1633
        %v1636 = vunpack.c.l.s4 1934713408
        %v1637 = vunpack.c.0.s8 %v1636
        %v1638 = vlaneseq
        %v1639 = vshrl.u32 %v1638, 7
        %v1640 = vsub.s32 %v1637, %v1639
        %v1641 = vrot.slane %v1627, %v1640
        %v1642 = vcombine.low %v1618, %v1634
        %v1643 = vcombine.high %v1618, %v1634
        %v1644 = vcombine.low %v1625, %v1641
        %v1645 = vcombine.high %v1625, %v1641
        %v1646 = vcombine.low %v1550, %v1557
        %v1648 = vunpack.c.l.s4 1983009808
        %v1649 = vunpack.c.0.s8 %v1648
        %v1650 = vlaneseq
        %v1651 = vshrl.u32 %v1650, 7
        %v1652 = vsub.s32 %v1649, %v1651
        %v1653 = vrot.slane %v1646, %v1652
        %v1654 = vcombine.low %v1574, %v1575
        %v1656 = vunpack.c.l.s4 1983009808
        %v1657 = vunpack.c.0.s8 %v1656
        %v1658 = vlaneseq
        %v1659 = vshrl.u32 %v1658, 7
        %v1660 = vsub.s32 %v1657, %v1659
        %v1661 = vrot.slane %v1654, %v1660
        %v1662 = vcombine.low %v1566, %v1573
        %v1664 = vunpack.c.l.s4 1983009808
        %v1665 = vunpack.c.0.s8 %v1664
        %v1666 = vlaneseq
        %v1667 = vshrl.u32 %v1666, 7
        %v1668 = vsub.s32 %v1665, %v1667
        %v1669 = vrot.slane %v1662, %v1668
        %v1670 = vcombine.low %v1576, %v1577
        %v1672 = vunpack.c.l.s4 1983009808
        %v1673 = vunpack.c.0.s8 %v1672
        %v1674 = vlaneseq
        %v1675 = vshrl.u32 %v1674, 7
        %v1676 = vsub.s32 %v1673, %v1675
        %v1677 = vrot.slane %v1670, %v1676
        %v1678 = vcombine.low %v1653, %v1661
        %v1679 = vcombine.high %v1653, %v1661
        %v1681 = vunpack.c.l.s4 1934713408
        %v1682 = vunpack.c.0.s8 %v1681
        %v1683 = vlaneseq
        %v1684 = vshrl.u32 %v1683, 7
        %v1685 = vsub.s32 %v1682, %v1684
        %v1686 = vrot.slane %v1678, %v1685
        %v1688 = vunpack.c.l.s4 1934713408
        %v1689 = vunpack.c.0.s8 %v1688
        %v1690 = vlaneseq
        %v1691 = vshrl.u32 %v1690, 7
        %v1692 = vsub.s32 %v1689, %v1691
        %v1693 = vrot.slane %v1679, %v1692
        %v1694 = vcombine.low %v1669, %v1677
        %v1695 = vcombine.high %v1669, %v1677
        %v1697 = vunpack.c.l.s4 1934713408
        %v1698 = vunpack.c.0.s8 %v1697
        %v1699 = vlaneseq
        %v1700 = vshrl.u32 %v1699, 7
        %v1701 = vsub.s32 %v1698, %v1700
        %v1702 = vrot.slane %v1694, %v1701
        %v1704 = vunpack.c.l.s4 1934713408
        %v1705 = vunpack.c.0.s8 %v1704
        %v1706 = vlaneseq
        %v1707 = vshrl.u32 %v1706, 7
        %v1708 = vsub.s32 %v1705, %v1707
        %v1709 = vrot.slane %v1695, %v1708
        %v1710 = vcombine.low %v1686, %v1702
        %v1711 = vcombine.high %v1686, %v1702
        %v1712 = vcombine.low %v1693, %v1709
        %v1713 = vcombine.high %v1693, %v1709
        %v1714 = vpack.c.bf16 %v1126, %v1058
        %v1715 = vpack.c.bf16 %v1127, %v1059
        %v1716 = vpack.c.bf16 %v1128, %v1060
        %v1717 = vpack.c.bf16 %v1129, %v1061
        %v1718 = vpack.c.bf16 %v1418, %v1350
        %v1719 = vpack.c.bf16 %v1419, %v1351
        %v1720 = vpack.c.bf16 %v1420, %v1352
        %v1721 = vpack.c.bf16 %v1421, %v1353
        %vm1722 = vcmask 261120
        %v1724 = vsel %vm1722, %v1714, 0
        %v1727 = vsel %vm1722, %v1718, 0
        %1729 = vmatprep.subr.bf16.mxu0 0
        %1730 = vmatpush1.bf16.xpose.msra.mxu0 0
        %1731 = vmatprep.subr.bf16.mxu0 0
        %1732 = vmatpush1.bf16.xpose.msra.mxu0 0
        %1733 = vmatprep.subr.bf16.mxu0 0
        %1734 = vmatpush1.bf16.xpose.msra.mxu0 0
        %1735 = vmatprep.subr.bf16.mxu0 0
        %1736 = vmatpush1.bf16.xpose.msra.mxu0 0
        %1737 = vmatprep.subr.bf16.mxu0 0
        %1738 = vmatpush1.bf16.xpose.msra.mxu0 0
        %1739 = vmatprep.subr.bf16.mxu0 0
        %1740 = vmatpush1.bf16.xpose.msra.mxu0 0
        %1741 = vmatprep.subr.bf16.mxu0 0
        %1742 = vmatpush1.bf16.xpose.msra.mxu0 0
        %1743 = vmatprep.subr.bf16.mxu0 0
        %1744 = vmatpush1.bf16.xpose.msra.mxu0 %v1727
        %1745 = vmatprep.subr.bf16.mxu0 0
        %1746 = vmatpush2.bf16.xpose.msra.mxu0 0
        %1747 = vmatprep.subr.bf16.mxu0 0
        %1748 = vmatpush2.bf16.xpose.msra.mxu0 0
        %1749 = vmatprep.subr.bf16.mxu0 0
        %1750 = vmatpush2.bf16.xpose.msra.mxu0 0
        %1751 = vmatprep.subr.bf16.mxu0 0
        %1752 = vmatpush2.bf16.xpose.msra.mxu0 0
        %1753 = vmatprep.subr.bf16.mxu0 0
        %1754 = vmatpush2.bf16.xpose.msra.mxu0 0
        %1755 = vmatprep.subr.bf16.mxu0 0
        %1756 = vmatpush2.bf16.xpose.msra.mxu0 0
        %1757 = vmatprep.subr.bf16.mxu0 0
        %1758 = vmatpush2.bf16.xpose.msra.mxu0 0
        %1759 = vmatprep.subr.bf16.mxu0 0
        %1760 = vmatpush2.bf16.xpose.msra.mxu0 0
        %1761 = vmatprep.mubr.bf16.mxu0 0
        %1762 = vmatmul.mubr.bf16.gmra.mxu0 %v1724
        %v1763 = vpop.f32.mrf.mxu0
        %v1764 = vadd.f32 0.0, %v1763
        %v1765 = vpop.f32.mrf.mxu0
        %v1766 = vpop.f32.mrf.mxu0
        %v1767 = vadd.f32 0.0, %v1766
        %v1768 = vpop.f32.mrf.mxu0
        %1769 = vdwg.mxu0
        %v1771 = vsel %vm1722, %v1715, 0
        %v1774 = vsel %vm1722, %v1719, 0
        %1776 = vmatprep.subr.bf16.mxu0 0
        %1777 = vmatpush1.bf16.xpose.msra.mxu0 0
        %1778 = vmatprep.subr.bf16.mxu0 0
        %1779 = vmatpush1.bf16.xpose.msra.mxu0 0
        %1780 = vmatprep.subr.bf16.mxu0 0
        %1781 = vmatpush1.bf16.xpose.msra.mxu0 0
        %1782 = vmatprep.subr.bf16.mxu0 0
        %1783 = vmatpush1.bf16.xpose.msra.mxu0 0
        %1784 = vmatprep.subr.bf16.mxu0 0
        %1785 = vmatpush1.bf16.xpose.msra.mxu0 0
        %1786 = vmatprep.subr.bf16.mxu0 0
        %1787 = vmatpush1.bf16.xpose.msra.mxu0 0
        %1788 = vmatprep.subr.bf16.mxu0 0
        %1789 = vmatpush1.bf16.xpose.msra.mxu0 0
        %1790 = vmatprep.subr.bf16.mxu0 0
        %1791 = vmatpush1.bf16.xpose.msra.mxu0 %v1774
        %1792 = vmatprep.subr.bf16.mxu0 0
        %1793 = vmatpush2.bf16.xpose.msra.mxu0 0
        %1794 = vmatprep.subr.bf16.mxu0 0
        %1795 = vmatpush2.bf16.xpose.msra.mxu0 0
        %1796 = vmatprep.subr.bf16.mxu0 0
        %1797 = vmatpush2.bf16.xpose.msra.mxu0 0
        %1798 = vmatprep.subr.bf16.mxu0 0
        %1799 = vmatpush2.bf16.xpose.msra.mxu0 0
        %1800 = vmatprep.subr.bf16.mxu0 0
        %1801 = vmatpush2.bf16.xpose.msra.mxu0 0
        %1802 = vmatprep.subr.bf16.mxu0 0
        %1803 = vmatpush2.bf16.xpose.msra.mxu0 0
        %1804 = vmatprep.subr.bf16.mxu0 0
        %1805 = vmatpush2.bf16.xpose.msra.mxu0 0
        %1806 = vmatprep.subr.bf16.mxu0 0
        %1807 = vmatpush2.bf16.xpose.msra.mxu0 0
        %1808 = vmatprep.mubr.bf16.mxu0 0
        %1809 = vmatmul.mubr.bf16.gmra.mxu0 %v1771
        %v1810 = vpop.f32.mrf.mxu0
        %v1811 = vadd.f32 0.0, %v1810
        %v1812 = vpop.f32.mrf.mxu0
        %v1813 = vpop.f32.mrf.mxu0
        %v1814 = vadd.f32 0.0, %v1813
        %v1815 = vpop.f32.mrf.mxu0
        %1816 = vdwg.mxu0
        %v1818 = vsel %vm1722, %v1716, 0
        %v1821 = vsel %vm1722, %v1720, 0
        %1823 = vmatprep.subr.bf16.mxu0 0
        %1824 = vmatpush1.bf16.xpose.msra.mxu0 0
        %1825 = vmatprep.subr.bf16.mxu0 0
        %1826 = vmatpush1.bf16.xpose.msra.mxu0 0
        %1827 = vmatprep.subr.bf16.mxu0 0
        %1828 = vmatpush1.bf16.xpose.msra.mxu0 0
        %1829 = vmatprep.subr.bf16.mxu0 0
        %1830 = vmatpush1.bf16.xpose.msra.mxu0 0
        %1831 = vmatprep.subr.bf16.mxu0 0
        %1832 = vmatpush1.bf16.xpose.msra.mxu0 0
        %1833 = vmatprep.subr.bf16.mxu0 0
        %1834 = vmatpush1.bf16.xpose.msra.mxu0 0
        %1835 = vmatprep.subr.bf16.mxu0 0
        %1836 = vmatpush1.bf16.xpose.msra.mxu0 0
        %1837 = vmatprep.subr.bf16.mxu0 0
        %1838 = vmatpush1.bf16.xpose.msra.mxu0 %v1821
        %1839 = vmatprep.subr.bf16.mxu0 0
        %1840 = vmatpush2.bf16.xpose.msra.mxu0 0
        %1841 = vmatprep.subr.bf16.mxu0 0
        %1842 = vmatpush2.bf16.xpose.msra.mxu0 0
        %1843 = vmatprep.subr.bf16.mxu0 0
        %1844 = vmatpush2.bf16.xpose.msra.mxu0 0
        %1845 = vmatprep.subr.bf16.mxu0 0
        %1846 = vmatpush2.bf16.xpose.msra.mxu0 0
        %1847 = vmatprep.subr.bf16.mxu0 0
        %1848 = vmatpush2.bf16.xpose.msra.mxu0 0
        %1849 = vmatprep.subr.bf16.mxu0 0
        %1850 = vmatpush2.bf16.xpose.msra.mxu0 0
        %1851 = vmatprep.subr.bf16.mxu0 0
        %1852 = vmatpush2.bf16.xpose.msra.mxu0 0
        %1853 = vmatprep.subr.bf16.mxu0 0
        %1854 = vmatpush2.bf16.xpose.msra.mxu0 0
        %1855 = vmatprep.mubr.bf16.mxu0 0
        %1856 = vmatmul.mubr.bf16.gmra.mxu0 %v1818
        %v1857 = vpop.f32.mrf.mxu0
        %v1858 = vadd.f32 0.0, %v1857
        %v1859 = vpop.f32.mrf.mxu0
        %v1860 = vpop.f32.mrf.mxu0
        %v1861 = vadd.f32 0.0, %v1860
        %v1862 = vpop.f32.mrf.mxu0
        %1863 = vdwg.mxu0
        %v1865 = vsel %vm1722, %v1717, 0
        %v1868 = vsel %vm1722, %v1721, 0
        %1870 = vmatprep.subr.bf16.mxu0 0
        %1871 = vmatpush1.bf16.xpose.msra.mxu0 0
        %1872 = vmatprep.subr.bf16.mxu0 0
        %1873 = vmatpush1.bf16.xpose.msra.mxu0 0
        %1874 = vmatprep.subr.bf16.mxu0 0
        %1875 = vmatpush1.bf16.xpose.msra.mxu0 0
        %1876 = vmatprep.subr.bf16.mxu0 0
        %1877 = vmatpush1.bf16.xpose.msra.mxu0 0
        %1878 = vmatprep.subr.bf16.mxu0 0
        %1879 = vmatpush1.bf16.xpose.msra.mxu0 0
        %1880 = vmatprep.subr.bf16.mxu0 0
        %1881 = vmatpush1.bf16.xpose.msra.mxu0 0
        %1882 = vmatprep.subr.bf16.mxu0 0
        %1883 = vmatpush1.bf16.xpose.msra.mxu0 0
        %1884 = vmatprep.subr.bf16.mxu0 0
        %1885 = vmatpush1.bf16.xpose.msra.mxu0 %v1868
        %1886 = vmatprep.subr.bf16.mxu0 0
        %1887 = vmatpush2.bf16.xpose.msra.mxu0 0
        %1888 = vmatprep.subr.bf16.mxu0 0
        %1889 = vmatpush2.bf16.xpose.msra.mxu0 0
        %1890 = vmatprep.subr.bf16.mxu0 0
        %1891 = vmatpush2.bf16.xpose.msra.mxu0 0
        %1892 = vmatprep.subr.bf16.mxu0 0
        %1893 = vmatpush2.bf16.xpose.msra.mxu0 0
        %1894 = vmatprep.subr.bf16.mxu0 0
        %1895 = vmatpush2.bf16.xpose.msra.mxu0 0
        %1896 = vmatprep.subr.bf16.mxu0 0
        %1897 = vmatpush2.bf16.xpose.msra.mxu0 0
        %1898 = vmatprep.subr.bf16.mxu0 0
        %1899 = vmatpush2.bf16.xpose.msra.mxu0 0
        %1900 = vmatprep.subr.bf16.mxu0 0
        %1901 = vmatpush2.bf16.xpose.msra.mxu0 0
        %1902 = vmatprep.mubr.bf16.mxu0 0
        %1903 = vmatmul.mubr.bf16.gmra.mxu0 %v1865
        %v1904 = vpop.f32.mrf.mxu0
        %v1905 = vadd.f32 0.0, %v1904
        %v1906 = vpop.f32.mrf.mxu0
        %v1907 = vpop.f32.mrf.mxu0
        %v1908 = vadd.f32 0.0, %v1907
        %v1909 = vpop.f32.mrf.mxu0
        %1910 = vdwg.mxu0
        %vm1911 = vcmask 130048
        %v1912 = vsel %vm1911, %v1764, -inf
        %1913 = vmax.xlane.f32.xlu0 %v1912
        %v1914 = vpop.xlane.xlu0 %1913
        %v1915 = vsel %vm1911, %v1767, -inf
        %1916 = vmax.xlane.f32.xlu0 %v1915
        %v1917 = vpop.xlane.xlu0 %1916
        %v1918 = vsel %vm1911, %v1811, -inf
        %1919 = vmax.xlane.f32.xlu0 %v1918
        %v1920 = vpop.xlane.xlu0 %1919
        %v1921 = vsel %vm1911, %v1814, -inf
        %1922 = vmax.xlane.f32.xlu0 %v1921
        %v1923 = vpop.xlane.xlu0 %1922
        %v1924 = vsel %vm1911, %v1858, -inf
        %1925 = vmax.xlane.f32.xlu0 %v1924
        %v1926 = vpop.xlane.xlu0 %1925
        %v1927 = vsel %vm1911, %v1861, -inf
        %1928 = vmax.xlane.f32.xlu0 %v1927
        %v1929 = vpop.xlane.xlu0 %1928
        %v1930 = vsel %vm1911, %v1905, -inf
        %1931 = vmax.xlane.f32.xlu0 %v1930
        %v1932 = vpop.xlane.xlu0 %1931
        %v1933 = vsel %vm1911, %v1908, -inf
        %1934 = vmax.xlane.f32.xlu0 %v1933
        %v1935 = vpop.xlane.xlu0 %1934
        %v1936 = vsub.f32 %v1764, %v1914
        %v1937 = vsub.f32 %v1767, %v1917
        %v1938 = vsub.f32 %v1811, %v1920
        %v1939 = vsub.f32 %v1814, %v1923
        %v1940 = vsub.f32 %v1858, %v1926
        %v1941 = vsub.f32 %v1861, %v1929
        %v1942 = vsub.f32 %v1905, %v1932
        %v1943 = vsub.f32 %v1908, %v1935
        %v1944 = vmul.f32 %v1936, 1.442695
        %v1945 = vpow.pop %v1944
        %v1946 = vmul.f32 %v1937, 1.442695
        %v1947 = vpow.pop %v1946
        %v1948 = vmul.f32 %v1938, 1.442695
        %v1949 = vpow.pop %v1948
        %v1950 = vmul.f32 %v1939, 1.442695
        %v1951 = vpow.pop %v1950
        %v1952 = vmul.f32 %v1940, 1.442695
        %v1953 = vpow.pop %v1952
        %v1954 = vmul.f32 %v1941, 1.442695
        %v1955 = vpow.pop %v1954
        %v1956 = vmul.f32 %v1942, 1.442695
        %v1957 = vpow.pop %v1956
        %v1958 = vmul.f32 %v1943, 1.442695
        %v1959 = vpow.pop %v1958
        %v1960 = vsel %vm1911, %v1945, 0.0
        %1961 = vadd.xlane.f32.xlu0 %v1960
        %v1962 = vpop.xlane.xlu0 %1961
        %v1963 = vsel %vm1911, %v1947, 0.0
        %1964 = vadd.xlane.f32.xlu0 %v1963
        %v1965 = vpop.xlane.xlu0 %1964
        %v1966 = vsel %vm1911, %v1949, 0.0
        %1967 = vadd.xlane.f32.xlu0 %v1966
        %v1968 = vpop.xlane.xlu0 %1967
        %v1969 = vsel %vm1911, %v1951, 0.0
        %1970 = vadd.xlane.f32.xlu0 %v1969
        %v1971 = vpop.xlane.xlu0 %1970
        %v1972 = vsel %vm1911, %v1953, 0.0
        %1973 = vadd.xlane.f32.xlu0 %v1972
        %v1974 = vpop.xlane.xlu0 %1973
        %v1975 = vsel %vm1911, %v1955, 0.0
        %1976 = vadd.xlane.f32.xlu0 %v1975
        %v1977 = vpop.xlane.xlu0 %1976
        %v1978 = vsel %vm1911, %v1957, 0.0
        %1979 = vadd.xlane.f32.xlu0 %v1978
        %v1980 = vpop.xlane.xlu0 %1979
        %v1981 = vsel %vm1911, %v1959, 0.0
        %1982 = vadd.xlane.f32.xlu0 %v1981
        %v1983 = vpop.xlane.xlu0 %1982
        %v1984 = vrcp.pop %v1962
        %v1985 = vrcp.pop %v1965
        %v1986 = vrcp.pop %v1968
        %v1987 = vrcp.pop %v1971
        %v1988 = vrcp.pop %v1974
        %v1989 = vrcp.pop %v1977
        %v1990 = vrcp.pop %v1980
        %v1991 = vrcp.pop %v1983
        %v1992 = vmul.f32 %v1945, %v1984
        %v1993 = vmul.f32 %v1947, %v1985
        %v1994 = vmul.f32 %v1949, %v1986
        %v1995 = vmul.f32 %v1951, %v1987
        %v1996 = vmul.f32 %v1953, %v1988
        %v1997 = vmul.f32 %v1955, %v1989
        %v1998 = vmul.f32 %v1957, %v1990
        %v1999 = vmul.f32 %v1959, %v1991
        %v2000 = vpack.c.bf16 %v1993, %v1992
        %v2001 = vpack.c.bf16 %v1995, %v1994
        %v2002 = vpack.c.bf16 %v1997, %v1996
        %v2003 = vpack.c.bf16 %v1999, %v1998
        %v2004 = vpack.c.bf16 %v1710, %v1642
        %v2005 = vpack.c.bf16 %v1711, %v1643
        %v2006 = vpack.c.bf16 %v1712, %v1644
        %v2007 = vpack.c.bf16 %v1713, %v1645
        %v2009 = vsel %vm1911, %v2000, 0
        %2011 = vmatprep.subr.bf16.mxu0 0
        %2012 = vmatpush1.bf16.msra.mxu0 0
        %2013 = vmatprep.subr.bf16.mxu0 0
        %2014 = vmatpush1.bf16.msra.mxu0 0
        %2015 = vmatprep.subr.bf16.mxu0 0
        %2016 = vmatpush1.bf16.msra.mxu0 0
        %2017 = vmatprep.subr.bf16.mxu0 0
        %2018 = vmatpush1.bf16.msra.mxu0 0
        %2019 = vmatprep.subr.bf16.mxu0 0
        %2020 = vmatpush1.bf16.msra.mxu0 0
        %2021 = vmatprep.subr.bf16.mxu0 0
        %2022 = vmatpush1.bf16.msra.mxu0 0
        %2023 = vmatprep.subr.bf16.mxu0 0
        %2024 = vmatpush1.bf16.msra.mxu0 0
        %2025 = vmatprep.subr.bf16.mxu0 0
        %2026 = vmatpush1.bf16.msra.mxu0 %v2004
        %2027 = vmatprep.subr.bf16.mxu0 0
        %2028 = vmatpush2.bf16.msra.mxu0 0
        %2029 = vmatprep.subr.bf16.mxu0 0
        %2030 = vmatpush2.bf16.msra.mxu0 0
        %2031 = vmatprep.subr.bf16.mxu0 0
        %2032 = vmatpush2.bf16.msra.mxu0 0
        %2033 = vmatprep.subr.bf16.mxu0 0
        %2034 = vmatpush2.bf16.msra.mxu0 0
        %2035 = vmatprep.subr.bf16.mxu0 0
        %2036 = vmatpush2.bf16.msra.mxu0 0
        %2037 = vmatprep.subr.bf16.mxu0 0
        %2038 = vmatpush2.bf16.msra.mxu0 0
        %2039 = vmatprep.subr.bf16.mxu0 0
        %2040 = vmatpush2.bf16.msra.mxu0 0
        %2041 = vmatprep.subr.bf16.mxu0 0
        %2042 = vmatpush2.bf16.msra.mxu0 0
        %2043 = vmatprep.mubr.bf16.mxu0 0
        %2044 = vmatmul.mubr.bf16.gmra.mxu0 %v2009
        %v2045 = vpop.f32.mrf.mxu0
        %v2046 = vadd.f32 0.0, %v2045
        %v2047 = vpop.f32.mrf.mxu0
        %v2048 = vpop.f32.mrf.mxu0
        %v2049 = vadd.f32 0.0, %v2048
        %v2050 = vpop.f32.mrf.mxu0
        %2051 = vdwg.mxu0
        %v2053 = vsel %vm1911, %v2001, 0
        %2055 = vmatprep.subr.bf16.mxu0 0
        %2056 = vmatpush1.bf16.msra.mxu0 0
        %2057 = vmatprep.subr.bf16.mxu0 0
        %2058 = vmatpush1.bf16.msra.mxu0 0
        %2059 = vmatprep.subr.bf16.mxu0 0
        %2060 = vmatpush1.bf16.msra.mxu0 0
        %2061 = vmatprep.subr.bf16.mxu0 0
        %2062 = vmatpush1.bf16.msra.mxu0 0
        %2063 = vmatprep.subr.bf16.mxu0 0
        %2064 = vmatpush1.bf16.msra.mxu0 0
        %2065 = vmatprep.subr.bf16.mxu0 0
        %2066 = vmatpush1.bf16.msra.mxu0 0
        %2067 = vmatprep.subr.bf16.mxu0 0
        %2068 = vmatpush1.bf16.msra.mxu0 0
        %2069 = vmatprep.subr.bf16.mxu0 0
        %2070 = vmatpush1.bf16.msra.mxu0 %v2005
        %2071 = vmatprep.subr.bf16.mxu0 0
        %2072 = vmatpush2.bf16.msra.mxu0 0
        %2073 = vmatprep.subr.bf16.mxu0 0
        %2074 = vmatpush2.bf16.msra.mxu0 0
        %2075 = vmatprep.subr.bf16.mxu0 0
        %2076 = vmatpush2.bf16.msra.mxu0 0
        %2077 = vmatprep.subr.bf16.mxu0 0
        %2078 = vmatpush2.bf16.msra.mxu0 0
        %2079 = vmatprep.subr.bf16.mxu0 0
        %2080 = vmatpush2.bf16.msra.mxu0 0
        %2081 = vmatprep.subr.bf16.mxu0 0
        %2082 = vmatpush2.bf16.msra.mxu0 0
        %2083 = vmatprep.subr.bf16.mxu0 0
        %2084 = vmatpush2.bf16.msra.mxu0 0
        %2085 = vmatprep.subr.bf16.mxu0 0
        %2086 = vmatpush2.bf16.msra.mxu0 0
        %2087 = vmatprep.mubr.bf16.mxu0 0
        %2088 = vmatmul.mubr.bf16.gmra.mxu0 %v2053
        %v2089 = vpop.f32.mrf.mxu0
        %v2090 = vadd.f32 0.0, %v2089
        %v2091 = vpop.f32.mrf.mxu0
        %v2092 = vpop.f32.mrf.mxu0
        %v2093 = vadd.f32 0.0, %v2092
        %v2094 = vpop.f32.mrf.mxu0
        %2095 = vdwg.mxu0
        %v2097 = vsel %vm1911, %v2002, 0
        %2099 = vmatprep.subr.bf16.mxu0 0
        %2100 = vmatpush1.bf16.msra.mxu0 0
        %2101 = vmatprep.subr.bf16.mxu0 0
        %2102 = vmatpush1.bf16.msra.mxu0 0
        %2103 = vmatprep.subr.bf16.mxu0 0
        %2104 = vmatpush1.bf16.msra.mxu0 0
        %2105 = vmatprep.subr.bf16.mxu0 0
        %2106 = vmatpush1.bf16.msra.mxu0 0
        %2107 = vmatprep.subr.bf16.mxu0 0
        %2108 = vmatpush1.bf16.msra.mxu0 0
        %2109 = vmatprep.subr.bf16.mxu0 0
        %2110 = vmatpush1.bf16.msra.mxu0 0
        %2111 = vmatprep.subr.bf16.mxu0 0
        %2112 = vmatpush1.bf16.msra.mxu0 0
        %2113 = vmatprep.subr.bf16.mxu0 0
        %2114 = vmatpush1.bf16.msra.mxu0 %v2006
        %2115 = vmatprep.subr.bf16.mxu0 0
        %2116 = vmatpush2.bf16.msra.mxu0 0
        %2117 = vmatprep.subr.bf16.mxu0 0
        %2118 = vmatpush2.bf16.msra.mxu0 0
        %2119 = vmatprep.subr.bf16.mxu0 0
        %2120 = vmatpush2.bf16.msra.mxu0 0
        %2121 = vmatprep.subr.bf16.mxu0 0
        %2122 = vmatpush2.bf16.msra.mxu0 0
        %2123 = vmatprep.subr.bf16.mxu0 0
        %2124 = vmatpush2.bf16.msra.mxu0 0
        %2125 = vmatprep.subr.bf16.mxu0 0
        %2126 = vmatpush2.bf16.msra.mxu0 0
        %2127 = vmatprep.subr.bf16.mxu0 0
        %2128 = vmatpush2.bf16.msra.mxu0 0
        %2129 = vmatprep.subr.bf16.mxu0 0
        %2130 = vmatpush2.bf16.msra.mxu0 0
        %2131 = vmatprep.mubr.bf16.mxu0 0
        %2132 = vmatmul.mubr.bf16.gmra.mxu0 %v2097
        %v2133 = vpop.f32.mrf.mxu0
        %v2134 = vadd.f32 0.0, %v2133
        %v2135 = vpop.f32.mrf.mxu0
        %v2136 = vpop.f32.mrf.mxu0
        %v2137 = vadd.f32 0.0, %v2136
        %v2138 = vpop.f32.mrf.mxu0
        %2139 = vdwg.mxu0
        %v2141 = vsel %vm1911, %v2003, 0
        %2143 = vmatprep.subr.bf16.mxu0 0
        %2144 = vmatpush1.bf16.msra.mxu0 0
        %2145 = vmatprep.subr.bf16.mxu0 0
        %2146 = vmatpush1.bf16.msra.mxu0 0
        %2147 = vmatprep.subr.bf16.mxu0 0
        %2148 = vmatpush1.bf16.msra.mxu0 0
        %2149 = vmatprep.subr.bf16.mxu0 0
        %2150 = vmatpush1.bf16.msra.mxu0 0
        %2151 = vmatprep.subr.bf16.mxu0 0
        %2152 = vmatpush1.bf16.msra.mxu0 0
        %2153 = vmatprep.subr.bf16.mxu0 0
        %2154 = vmatpush1.bf16.msra.mxu0 0
        %2155 = vmatprep.subr.bf16.mxu0 0
        %2156 = vmatpush1.bf16.msra.mxu0 0
        %2157 = vmatprep.subr.bf16.mxu0 0
        %2158 = vmatpush1.bf16.msra.mxu0 %v2007
        %2159 = vmatprep.subr.bf16.mxu0 0
        %2160 = vmatpush2.bf16.msra.mxu0 0
        %2161 = vmatprep.subr.bf16.mxu0 0
        %2162 = vmatpush2.bf16.msra.mxu0 0
        %2163 = vmatprep.subr.bf16.mxu0 0
        %2164 = vmatpush2.bf16.msra.mxu0 0
        %2165 = vmatprep.subr.bf16.mxu0 0
        %2166 = vmatpush2.bf16.msra.mxu0 0
        %2167 = vmatprep.subr.bf16.mxu0 0
        %2168 = vmatpush2.bf16.msra.mxu0 0
        %2169 = vmatprep.subr.bf16.mxu0 0
        %2170 = vmatpush2.bf16.msra.mxu0 0
        %2171 = vmatprep.subr.bf16.mxu0 0
        %2172 = vmatpush2.bf16.msra.mxu0 0
        %2173 = vmatprep.subr.bf16.mxu0 0
        %2174 = vmatpush2.bf16.msra.mxu0 0
        %2175 = vmatprep.mubr.bf16.mxu0 0
        %2176 = vmatmul.mubr.bf16.gmra.mxu0 %v2141
        %v2177 = vpop.f32.mrf.mxu0
        %v2178 = vadd.f32 0.0, %v2177
        %v2179 = vpop.f32.mrf.mxu0
        %v2180 = vpop.f32.mrf.mxu0
        %v2181 = vadd.f32 0.0, %v2180
        %v2182 = vpop.f32.mrf.mxu0
        %2183 = vdwg.mxu0
        %v2184 = vcombine.low %v2046, %v2134
        %v2185 = vcombine.high %v2046, %v2134
        %v2187 = vunpack.c.l.s4 1983009808
        %v2188 = vunpack.c.0.s8 %v2187
        %v2189 = vlaneseq
        %v2190 = vshrl.u32 %v2189, 7
        %v2191 = vsub.s32 %v2188, %v2190
        %v2192 = vrot.slane %v2184, %v2191
        %v2194 = vunpack.c.l.s4 1983009808
        %v2195 = vunpack.c.0.s8 %v2194
        %v2196 = vlaneseq
        %v2197 = vshrl.u32 %v2196, 7
        %v2198 = vsub.s32 %v2195, %v2197
        %v2199 = vrot.slane %v2185, %v2198
        %v2200 = vcombine.low %v2090, %v2178
        %v2201 = vcombine.high %v2090, %v2178
        %v2203 = vunpack.c.l.s4 1983009808
        %v2204 = vunpack.c.0.s8 %v2203
        %v2205 = vlaneseq
        %v2206 = vshrl.u32 %v2205, 7
        %v2207 = vsub.s32 %v2204, %v2206
        %v2208 = vrot.slane %v2200, %v2207
        %v2210 = vunpack.c.l.s4 1983009808
        %v2211 = vunpack.c.0.s8 %v2210
        %v2212 = vlaneseq
        %v2213 = vshrl.u32 %v2212, 7
        %v2214 = vsub.s32 %v2211, %v2213
        %v2215 = vrot.slane %v2201, %v2214
        %v2216 = vcombine.low %v2192, %v2208
        %v2217 = vcombine.high %v2192, %v2208
        %v2219 = vunpack.c.l.s4 1934713408
        %v2220 = vunpack.c.0.s8 %v2219
        %v2221 = vlaneseq
        %v2222 = vshrl.u32 %v2221, 7
        %v2223 = vsub.s32 %v2220, %v2222
        %v2224 = vrot.slane %v2216, %v2223
        %v2226 = vunpack.c.l.s4 1934713408
        %v2227 = vunpack.c.0.s8 %v2226
        %v2228 = vlaneseq
        %v2229 = vshrl.u32 %v2228, 7
        %v2230 = vsub.s32 %v2227, %v2229
        %v2231 = vrot.slane %v2217, %v2230
        %v2232 = vcombine.low %v2199, %v2215
        %v2233 = vcombine.high %v2199, %v2215
        %v2235 = vunpack.c.l.s4 1934713408
        %v2236 = vunpack.c.0.s8 %v2235
        %v2237 = vlaneseq
        %v2238 = vshrl.u32 %v2237, 7
        %v2239 = vsub.s32 %v2236, %v2238
        %v2240 = vrot.slane %v2232, %v2239
        %v2242 = vunpack.c.l.s4 1934713408
        %v2243 = vunpack.c.0.s8 %v2242
        %v2244 = vlaneseq
        %v2245 = vshrl.u32 %v2244, 7
        %v2246 = vsub.s32 %v2243, %v2245
        %v2247 = vrot.slane %v2233, %v2246
        %v2248 = vcombine.high %v2224, 0.0
        %v2249 = vcombine.high %v2231, 0.0
        %v2250 = vcombine.high %v2240, 0.0
        %v2251 = vcombine.high %v2247, 0.0
        %v2252 = vcombine.low %v2049, %v2137
        %v2253 = vcombine.high %v2049, %v2137
        %v2255 = vunpack.c.l.s4 1983009808
        %v2256 = vunpack.c.0.s8 %v2255
        %v2257 = vlaneseq
        %v2258 = vshrl.u32 %v2257, 7
        %v2259 = vsub.s32 %v2256, %v2258
        %v2260 = vrot.slane %v2252, %v2259
        %v2262 = vunpack.c.l.s4 1983009808
        %v2263 = vunpack.c.0.s8 %v2262
        %v2264 = vlaneseq
        %v2265 = vshrl.u32 %v2264, 7
        %v2266 = vsub.s32 %v2263, %v2265
        %v2267 = vrot.slane %v2253, %v2266
        %v2268 = vcombine.low %v2093, %v2181
        %v2269 = vcombine.high %v2093, %v2181
        %v2271 = vunpack.c.l.s4 1983009808
        %v2272 = vunpack.c.0.s8 %v2271
        %v2273 = vlaneseq
        %v2274 = vshrl.u32 %v2273, 7
        %v2275 = vsub.s32 %v2272, %v2274
        %v2276 = vrot.slane %v2268, %v2275
        %v2278 = vunpack.c.l.s4 1983009808
        %v2279 = vunpack.c.0.s8 %v2278
        %v2280 = vlaneseq
        %v2281 = vshrl.u32 %v2280, 7
        %v2282 = vsub.s32 %v2279, %v2281
        %v2283 = vrot.slane %v2269, %v2282
        %v2284 = vcombine.low %v2260, %v2276
        %v2285 = vcombine.high %v2260, %v2276
        %v2287 = vunpack.c.l.s4 1934713408
        %v2288 = vunpack.c.0.s8 %v2287
        %v2289 = vlaneseq
        %v2290 = vshrl.u32 %v2289, 7
        %v2291 = vsub.s32 %v2288, %v2290
        %v2292 = vrot.slane %v2284, %v2291
        %v2294 = vunpack.c.l.s4 1934713408
        %v2295 = vunpack.c.0.s8 %v2294
        %v2296 = vlaneseq
        %v2297 = vshrl.u32 %v2296, 7
        %v2298 = vsub.s32 %v2295, %v2297
        %v2299 = vrot.slane %v2285, %v2298
        %v2300 = vcombine.low %v2267, %v2283
        %v2301 = vcombine.high %v2267, %v2283
        %v2303 = vunpack.c.l.s4 1934713408
        %v2304 = vunpack.c.0.s8 %v2303
        %v2305 = vlaneseq
        %v2306 = vshrl.u32 %v2305, 7
        %v2307 = vsub.s32 %v2304, %v2306
        %v2308 = vrot.slane %v2300, %v2307
        %v2310 = vunpack.c.l.s4 1934713408
        %v2311 = vunpack.c.0.s8 %v2310
        %v2312 = vlaneseq
        %v2313 = vshrl.u32 %v2312, 7
        %v2314 = vsub.s32 %v2311, %v2313
        %v2315 = vrot.slane %v2301, %v2314
        %v2316 = vcombine.high %v2292, 0.0
        %v2317 = vcombine.high %v2299, 0.0
        %v2318 = vcombine.high %v2308, 0.0
        %v2319 = vcombine.high %v2315, 0.0
        %v2320 = vcombine.low %v2224, %v2231
        %v2322 = vunpack.c.l.s4 1983009808
        %v2323 = vunpack.c.0.s8 %v2322
        %v2324 = vlaneseq
        %v2325 = vshrl.u32 %v2324, 7
        %v2326 = vsub.s32 %v2323, %v2325
        %v2327 = vrot.slane %v2320, %v2326
        %v2328 = vcombine.low %v2248, %v2249
        %v2330 = vunpack.c.l.s4 1983009808
        %v2331 = vunpack.c.0.s8 %v2330
        %v2332 = vlaneseq
        %v2333 = vshrl.u32 %v2332, 7
        %v2334 = vsub.s32 %v2331, %v2333
        %v2335 = vrot.slane %v2328, %v2334
        %v2336 = vcombine.low %v2240, %v2247
        %v2338 = vunpack.c.l.s4 1983009808
        %v2339 = vunpack.c.0.s8 %v2338
        %v2340 = vlaneseq
        %v2341 = vshrl.u32 %v2340, 7
        %v2342 = vsub.s32 %v2339, %v2341
        %v2343 = vrot.slane %v2336, %v2342
        %v2344 = vcombine.low %v2250, %v2251
        %v2346 = vunpack.c.l.s4 1983009808
        %v2347 = vunpack.c.0.s8 %v2346
        %v2348 = vlaneseq
        %v2349 = vshrl.u32 %v2348, 7
        %v2350 = vsub.s32 %v2347, %v2349
        %v2351 = vrot.slane %v2344, %v2350
        %v2352 = vcombine.low %v2327, %v2335
        %v2353 = vcombine.high %v2327, %v2335
        %v2355 = vunpack.c.l.s4 1934713408
        %v2356 = vunpack.c.0.s8 %v2355
        %v2357 = vlaneseq
        %v2358 = vshrl.u32 %v2357, 7
        %v2359 = vsub.s32 %v2356, %v2358
        %v2360 = vrot.slane %v2352, %v2359
        %v2362 = vunpack.c.l.s4 1934713408
        %v2363 = vunpack.c.0.s8 %v2362
        %v2364 = vlaneseq
        %v2365 = vshrl.u32 %v2364, 7
        %v2366 = vsub.s32 %v2363, %v2365
        %v2367 = vrot.slane %v2353, %v2366
        %v2368 = vcombine.low %v2343, %v2351
        %v2369 = vcombine.high %v2343, %v2351
        %v2371 = vunpack.c.l.s4 1934713408
        %v2372 = vunpack.c.0.s8 %v2371
        %v2373 = vlaneseq
        %v2374 = vshrl.u32 %v2373, 7
        %v2375 = vsub.s32 %v2372, %v2374
        %v2376 = vrot.slane %v2368, %v2375
        %v2378 = vunpack.c.l.s4 1934713408
        %v2379 = vunpack.c.0.s8 %v2378
        %v2380 = vlaneseq
        %v2381 = vshrl.u32 %v2380, 7
        %v2382 = vsub.s32 %v2379, %v2381
        %v2383 = vrot.slane %v2369, %v2382
        %v2384 = vcombine.low %v2360, %v2376
        %v2385 = vcombine.high %v2360, %v2376
        %v2386 = vcombine.low %v2367, %v2383
        %v2387 = vcombine.high %v2367, %v2383
        %v2388 = vcombine.low %v2292, %v2299
        %v2390 = vunpack.c.l.s4 1983009808
        %v2391 = vunpack.c.0.s8 %v2390
        %v2392 = vlaneseq
        %v2393 = vshrl.u32 %v2392, 7
        %v2394 = vsub.s32 %v2391, %v2393
        %v2395 = vrot.slane %v2388, %v2394
        %v2396 = vcombine.low %v2316, %v2317
        %v2398 = vunpack.c.l.s4 1983009808
        %v2399 = vunpack.c.0.s8 %v2398
        %v2400 = vlaneseq
        %v2401 = vshrl.u32 %v2400, 7
        %v2402 = vsub.s32 %v2399, %v2401
        %v2403 = vrot.slane %v2396, %v2402
        %v2404 = vcombine.low %v2308, %v2315
        %v2406 = vunpack.c.l.s4 1983009808
        %v2407 = vunpack.c.0.s8 %v2406
        %v2408 = vlaneseq
        %v2409 = vshrl.u32 %v2408, 7
        %v2410 = vsub.s32 %v2407, %v2409
        %v2411 = vrot.slane %v2404, %v2410
        %v2412 = vcombine.low %v2318, %v2319
        %v2414 = vunpack.c.l.s4 1983009808
        %v2415 = vunpack.c.0.s8 %v2414
        %v2416 = vlaneseq
        %v2417 = vshrl.u32 %v2416, 7
        %v2418 = vsub.s32 %v2415, %v2417
        %v2419 = vrot.slane %v2412, %v2418
        %v2420 = vcombine.low %v2395, %v2403
        %v2421 = vcombine.high %v2395, %v2403
        %v2423 = vunpack.c.l.s4 1934713408
        %v2424 = vunpack.c.0.s8 %v2423
        %v2425 = vlaneseq
        %v2426 = vshrl.u32 %v2425, 7
        %v2427 = vsub.s32 %v2424, %v2426
        %v2428 = vrot.slane %v2420, %v2427
        %v2430 = vunpack.c.l.s4 1934713408
        %v2431 = vunpack.c.0.s8 %v2430
        %v2432 = vlaneseq
        %v2433 = vshrl.u32 %v2432, 7
        %v2434 = vsub.s32 %v2431, %v2433
        %v2435 = vrot.slane %v2421, %v2434
        %v2436 = vcombine.low %v2411, %v2419
        %v2437 = vcombine.high %v2411, %v2419
        %v2439 = vunpack.c.l.s4 1934713408
        %v2440 = vunpack.c.0.s8 %v2439
        %v2441 = vlaneseq
        %v2442 = vshrl.u32 %v2441, 7
        %v2443 = vsub.s32 %v2440, %v2442
        %v2444 = vrot.slane %v2436, %v2443
        %v2446 = vunpack.c.l.s4 1934713408
        %v2447 = vunpack.c.0.s8 %v2446
        %v2448 = vlaneseq
        %v2449 = vshrl.u32 %v2448, 7
        %v2450 = vsub.s32 %v2447, %v2449
        %v2451 = vrot.slane %v2437, %v2450
        %v2452 = vcombine.low %v2428, %v2444
        %v2453 = vcombine.high %v2428, %v2444
        %v2454 = vcombine.low %v2435, %v2451
        %v2455 = vcombine.high %v2435, %v2451
        %2458 = vrot.lane.b32.xlu0 %v2385, 32
        %v2459 = vpop.permute.xlu0 %2458
        %2460 = vrot.lane.b32.xlu0 %v2453, 32
        %v2461 = vpop.permute.xlu0 %2460
        %2466 = vrot.lane.b32.xlu0 %v2386, 64
        %v2467 = vpop.permute.xlu0 %2466
        %2468 = vrot.lane.b32.xlu0 %v2454, 64
        %v2469 = vpop.permute.xlu0 %2468
        %2474 = vrot.lane.b32.xlu0 %v2387, 96
        %v2475 = vpop.permute.xlu0 %2474
        %2476 = vrot.lane.b32.xlu0 %v2455, 96
        %v2477 = vpop.permute.xlu0 %2476
        %v2480 = vsel %vm1722, %v2384, %v2459
        %v2481 = vsel %vm1722, %v2452, %v2461
        %vm2482 = vcmask 523264
        %v2483 = vsel %vm2482, %v2480, %v2467
        %v2484 = vsel %vm2482, %v2481, %v2469
        %vm2485 = vcmask 785408
        %v2486 = vsel %vm2485, %v2483, %v2475
        %v2487 = vsel %vm2485, %v2484, %v2477
        %v2488 = vpack.c.bf16 %v2487, %v2486
        %v2489 = vld [vmem:[#allocation8] sm:$0xf]
        %v2490 = vld [vmem:[#allocation8 + $0x4] sm:$0xf]
        %v2491 = vld [vmem:[#allocation8 + $0x8] sm:$0xf]
        %v2492 = vld [vmem:[#allocation8 + $0xc] sm:$0xf]
        %v2493 = vld [vmem:[#allocation8 + $0x10] sm:$0xf]
        %v2494 = vld [vmem:[#allocation8 + $0x14] sm:$0xf]
        %v2495 = vld [vmem:[#allocation8 + $0x18] sm:$0xf]
        %v2496 = vld [vmem:[#allocation8 + $0x1c] sm:$0xf]
        %v2497 = vld [vmem:[#allocation8 + $0x20] sm:$0xf]
        %v2498 = vld [vmem:[#allocation8 + $0x24] sm:$0xf]
        %v2499 = vld [vmem:[#allocation8 + $0x28] sm:$0xf]
        %v2500 = vld [vmem:[#allocation8 + $0x2c] sm:$0xf]
        %v2501 = vld [vmem:[#allocation8 + $0x30] sm:$0xf]
        %v2502 = vld [vmem:[#allocation8 + $0x34] sm:$0xf]
        %v2503 = vld [vmem:[#allocation8 + $0x38] sm:$0xf]
        %v2504 = vld [vmem:[#allocation8 + $0x3c] sm:$0xf]
        %v2505 = vld [vmem:[%s5] sm:$0x1]
        %v2507 = vlaneseq
        %v2508 = vshrl.u32 %v2507, 7
        %v2509 = vsub.s32 0, %v2508
        %v2510 = vrot.slane %v2505, %v2509
        %v2528 = vunpack.c.l.b16 %v2489
        %v2529 = vunpack.c.l.b16 %v2490
        %v2530 = vunpack.c.l.b16 %v2491
        %v2531 = vunpack.c.l.b16 %v2492
        %v2532 = vunpack.c.l.b16 %v2493
        %v2533 = vunpack.c.l.b16 %v2494
        %v2534 = vunpack.c.l.b16 %v2495
        %v2535 = vunpack.c.l.b16 %v2496
        %v2536 = vunpack.c.l.b16 %v2497
        %v2537 = vunpack.c.l.b16 %v2498
        %v2538 = vunpack.c.l.b16 %v2499
        %v2539 = vunpack.c.l.b16 %v2500
        %v2540 = vunpack.c.l.b16 %v2501
        %v2541 = vunpack.c.l.b16 %v2502
        %v2542 = vunpack.c.l.b16 %v2503
        %v2543 = vunpack.c.l.b16 %v2504
        %v2544 = vpack.c.b16 %v2529, %v2528
        %v2545 = vpack.c.b16 %v2531, %v2530
        %v2546 = vpack.c.b16 %v2533, %v2532
        %v2547 = vpack.c.b16 %v2535, %v2534
        %v2548 = vpack.c.b16 %v2537, %v2536
        %v2549 = vpack.c.b16 %v2539, %v2538
        %v2550 = vpack.c.b16 %v2541, %v2540
        %v2551 = vpack.c.b16 %v2543, %v2542
        %2560 = vmatprep.subr.bf16.mxu0 0
        %2561 = vmatpush1.bf16.msra.mxu0 %v2551
        %2562 = vmatprep.subr.bf16.mxu0 0
        %2563 = vmatpush1.bf16.msra.mxu0 %v2550
        %2564 = vmatprep.subr.bf16.mxu0 0
        %2565 = vmatpush1.bf16.msra.mxu0 %v2549
        %2566 = vmatprep.subr.bf16.mxu0 0
        %2567 = vmatpush1.bf16.msra.mxu0 %v2548
        %2568 = vmatprep.subr.bf16.mxu0 0
        %2569 = vmatpush1.bf16.msra.mxu0 %v2547
        %2570 = vmatprep.subr.bf16.mxu0 0
        %2571 = vmatpush1.bf16.msra.mxu0 %v2546
        %2572 = vmatprep.subr.bf16.mxu0 0
        %2573 = vmatpush1.bf16.msra.mxu0 %v2545
        %2574 = vmatprep.subr.bf16.mxu0 0
        %2575 = vmatpush1.bf16.msra.mxu0 %v2544
        %2576 = vmatprep.subr.bf16.mxu0 0
        %2577 = vmatpush2.bf16.msra.mxu0 0
        %2578 = vmatprep.subr.bf16.mxu0 0
        %2579 = vmatpush2.bf16.msra.mxu0 0
        %2580 = vmatprep.subr.bf16.mxu0 0
        %2581 = vmatpush2.bf16.msra.mxu0 0
        %2582 = vmatprep.subr.bf16.mxu0 0
        %2583 = vmatpush2.bf16.msra.mxu0 0
        %2584 = vmatprep.subr.bf16.mxu0 0
        %2585 = vmatpush2.bf16.msra.mxu0 0
        %2586 = vmatprep.subr.bf16.mxu0 0
        %2587 = vmatpush2.bf16.msra.mxu0 0
        %2588 = vmatprep.subr.bf16.mxu0 0
        %2589 = vmatpush2.bf16.msra.mxu0 0
        %2590 = vmatprep.subr.bf16.mxu0 0
        %2591 = vmatpush2.bf16.msra.mxu0 0
        %2592 = vmatprep.mubr.bf16.mxu0 0
        %2593 = vmatmul.mubr.bf16.gmra.mxu0 %v2488
        %v2594 = vpop.f32.mrf.mxu0
        %v2595 = vadd.f32 %v2510, %v2594
        %v2596 = vpop.f32.mrf.mxu0
        %v2597 = vpop.f32.mrf.mxu0
        %v2598 = vadd.f32 %v2510, %v2597
        %v2599 = vpop.f32.mrf.mxu0
        %2600 = vdwg.mxu0
        %v2601 = vadd.f32 %v542, %v2595
        %v2602 = vadd.f32 %v543, %v2598
        %2603 = vst [vmem:[%s533] sm:$0xff] %v2601
        %2604 = vst [vmem:[%s533 + $0x8] sm:$0xff] %v2602
        %v2605 = vld [vmem:[%s6] sm:$0x1]
        %v2606 = vld [vmem:[%s7] sm:$0x1]
        %2607 = vadd.xlane.f32.xlu0 %v2601
        %v2608 = vpop.xlane.xlu0 %2607
        %2609 = vadd.xlane.f32.xlu0 %v2602
        %v2610 = vpop.xlane.xlu0 %2609
        %v2611 = vmul.f32 %v2608, %v550
        %v2612 = vmul.f32 %v2610, %v550
        %v2613 = vmul.f32 %v2601, %v2601
        %v2614 = vmul.f32 %v2602, %v2602
        %2615 = vadd.xlane.f32.xlu0 %v2613
        %v2616 = vpop.xlane.xlu0 %2615
        %2617 = vadd.xlane.f32.xlu0 %v2614
        %v2618 = vpop.xlane.xlu0 %2617
        %v2619 = vmul.f32 %v2616, %v550
        %v2620 = vmul.f32 %v2618, %v550
        %v2621 = vmul.f32 %v2611, %v2611
        %v2622 = vmul.f32 %v2612, %v2612
        %v2623 = vsub.f32 %v2619, %v2621
        %v2624 = vsub.f32 %v2620, %v2622
        %v2625 = vmax.f32 %v2623, 0.0
        %v2626 = vmax.f32 %v2624, 0.0
        %v2627 = vsub.f32 %v2601, %v2611
        %v2628 = vsub.f32 %v2602, %v2612
        %v2629 = vadd.f32 %v2625, 1e-05
        %v2630 = vadd.f32 %v2626, 1e-05
        %v2631 = vrsqrt.pop %v2629
        %v2632 = vrsqrt.pop %v2630
        %v2633 = vmul.f32 %v2627, %v2631
        %v2634 = vmul.f32 %v2628, %v2632
        %v2636 = vlaneseq
        %v2637 = vshrl.u32 %v2636, 7
        %v2638 = vsub.s32 0, %v2637
        %v2639 = vrot.slane %v2605, %v2638
        %v2641 = vmul.f32 %v2633, %v2639
        %v2642 = vmul.f32 %v2634, %v2639
        %v2644 = vlaneseq
        %v2645 = vshrl.u32 %v2644, 7
        %v2646 = vsub.s32 0, %v2645
        %v2647 = vrot.slane %v2606, %v2646
        %v2649 = vadd.f32 %v2641, %v2647
        %v2650 = vadd.f32 %v2642, %v2647
        %v2651 = vpack.c.bf16 %v2650, %v2649
        %v2652 = vld [vmem:[#allocation10] sm:$0xff]
        %v2653 = vld [vmem:[#allocation10 + $0x8] sm:$0xff]
        %v2654 = vld [vmem:[#allocation10 + $0x10] sm:$0xff]
        %v2655 = vld [vmem:[#allocation10 + $0x18] sm:$0xff]
        %v2656 = vld [vmem:[#allocation10 + $0x20] sm:$0xff]
        %v2657 = vld [vmem:[#allocation10 + $0x28] sm:$0xff]
        %v2658 = vld [vmem:[#allocation10 + $0x30] sm:$0xff]
        %v2659 = vld [vmem:[#allocation10 + $0x38] sm:$0xff]
        %v2660 = vld [vmem:[#allocation10 + $0x40] sm:$0xff]
        %v2661 = vld [vmem:[#allocation10 + $0x48] sm:$0xff]
        %v2662 = vld [vmem:[#allocation10 + $0x50] sm:$0xff]
        %v2663 = vld [vmem:[#allocation10 + $0x58] sm:$0xff]
        %v2664 = vld [vmem:[#allocation10 + $0x60] sm:$0xff]
        %v2665 = vld [vmem:[#allocation10 + $0x68] sm:$0xff]
        %v2666 = vld [vmem:[#allocation10 + $0x70] sm:$0xff]
        %v2667 = vld [vmem:[#allocation10 + $0x78] sm:$0xff]
        %v2668 = vld [vmem:[%s9] sm:$0x3]
        %v2670 = vlaneseq
        %v2671 = vshrl.u32 %v2670, 7
        %v2672 = vsub.s32 0, %v2671
        %v2673 = vrot.slane %v2668, %v2672
        %v2674 = vlaneseq
        %v2675 = vshrl.u32 %v2674, 7
        %v2676 = vsub.s32 1, %v2675
        %v2677 = vrot.slane %v2668, %v2676
        %v2696 = vunpack.c.l.b16 %v2652
        %v2697 = vunpack.c.h.b16 %v2652
        %v2698 = vunpack.c.l.b16 %v2653
        %v2699 = vunpack.c.h.b16 %v2653
        %v2700 = vunpack.c.l.b16 %v2654
        %v2701 = vunpack.c.h.b16 %v2654
        %v2702 = vunpack.c.l.b16 %v2655
        %v2703 = vunpack.c.h.b16 %v2655
        %v2704 = vunpack.c.l.b16 %v2656
        %v2705 = vunpack.c.h.b16 %v2656
        %v2706 = vunpack.c.l.b16 %v2657
        %v2707 = vunpack.c.h.b16 %v2657
        %v2708 = vunpack.c.l.b16 %v2658
        %v2709 = vunpack.c.h.b16 %v2658
        %v2710 = vunpack.c.l.b16 %v2659
        %v2711 = vunpack.c.h.b16 %v2659
        %v2712 = vunpack.c.l.b16 %v2660
        %v2713 = vunpack.c.h.b16 %v2660
        %v2714 = vunpack.c.l.b16 %v2661
        %v2715 = vunpack.c.h.b16 %v2661
        %v2716 = vunpack.c.l.b16 %v2662
        %v2717 = vunpack.c.h.b16 %v2662
        %v2718 = vunpack.c.l.b16 %v2663
        %v2719 = vunpack.c.h.b16 %v2663
        %v2720 = vunpack.c.l.b16 %v2664
        %v2721 = vunpack.c.h.b16 %v2664
        %v2722 = vunpack.c.l.b16 %v2665
        %v2723 = vunpack.c.h.b16 %v2665
        %v2724 = vunpack.c.l.b16 %v2666
        %v2725 = vunpack.c.h.b16 %v2666
        %v2726 = vunpack.c.l.b16 %v2667
        %v2727 = vunpack.c.h.b16 %v2667
        %v2728 = vpack.c.b16 %v2698, %v2696
        %v2729 = vpack.c.b16 %v2699, %v2697
        %v2730 = vpack.c.b16 %v2702, %v2700
        %v2731 = vpack.c.b16 %v2703, %v2701
        %v2732 = vpack.c.b16 %v2706, %v2704
        %v2733 = vpack.c.b16 %v2707, %v2705
        %v2734 = vpack.c.b16 %v2710, %v2708
        %v2735 = vpack.c.b16 %v2711, %v2709
        %v2736 = vpack.c.b16 %v2714, %v2712
        %v2737 = vpack.c.b16 %v2715, %v2713
        %v2738 = vpack.c.b16 %v2718, %v2716
        %v2739 = vpack.c.b16 %v2719, %v2717
        %v2740 = vpack.c.b16 %v2722, %v2720
        %v2741 = vpack.c.b16 %v2723, %v2721
        %v2742 = vpack.c.b16 %v2726, %v2724
        %v2743 = vpack.c.b16 %v2727, %v2725
        %2760 = vmatprep.subr.bf16.mxu0 %v2743
        %2761 = vmatpush1.bf16.msra.mxu0 %v2742
        %2762 = vmatprep.subr.bf16.mxu0 %v2741
        %2763 = vmatpush1.bf16.msra.mxu0 %v2740
        %2764 = vmatprep.subr.bf16.mxu0 %v2739
        %2765 = vmatpush1.bf16.msra.mxu0 %v2738
        %2766 = vmatprep.subr.bf16.mxu0 %v2737
        %2767 = vmatpush1.bf16.msra.mxu0 %v2736
        %2768 = vmatprep.subr.bf16.mxu0 %v2735
        %2769 = vmatpush1.bf16.msra.mxu0 %v2734
        %2770 = vmatprep.subr.bf16.mxu0 %v2733
        %2771 = vmatpush1.bf16.msra.mxu0 %v2732
        %2772 = vmatprep.subr.bf16.mxu0 %v2731
        %2773 = vmatpush1.bf16.msra.mxu0 %v2730
        %2774 = vmatprep.subr.bf16.mxu0 %v2729
        %2775 = vmatpush1.bf16.msra.mxu0 %v2728
        %2776 = vmatprep.subr.bf16.mxu0 0
        %2777 = vmatpush2.bf16.msra.mxu0 0
        %2778 = vmatprep.subr.bf16.mxu0 0
        %2779 = vmatpush2.bf16.msra.mxu0 0
        %2780 = vmatprep.subr.bf16.mxu0 0
        %2781 = vmatpush2.bf16.msra.mxu0 0
        %2782 = vmatprep.subr.bf16.mxu0 0
        %2783 = vmatpush2.bf16.msra.mxu0 0
        %2784 = vmatprep.subr.bf16.mxu0 0
        %2785 = vmatpush2.bf16.msra.mxu0 0
        %2786 = vmatprep.subr.bf16.mxu0 0
        %2787 = vmatpush2.bf16.msra.mxu0 0
        %2788 = vmatprep.subr.bf16.mxu0 0
        %2789 = vmatpush2.bf16.msra.mxu0 0
        %2790 = vmatprep.subr.bf16.mxu0 0
        %2791 = vmatpush2.bf16.msra.mxu0 0
        %2792 = vmatprep.mubr.bf16.mxu0 0
        %2793 = vmatmul.mubr.bf16.gmra.mxu0 %v2651
        %v2794 = vpop.f32.mrf.mxu0
        %v2795 = vadd.f32 %v2673, %v2794
        %v2796 = vpop.f32.mrf.mxu0
        %v2797 = vadd.f32 %v2677, %v2796
        %v2798 = vpop.f32.mrf.mxu0
        %v2799 = vadd.f32 %v2673, %v2798
        %v2800 = vpop.f32.mrf.mxu0
        %v2801 = vadd.f32 %v2677, %v2800
        %2802 = vdwg.mxu0
        %v2803 = vmul.f32 %v2795, 0.5
        %v2804 = vmul.f32 %v2797, 0.5
        %v2805 = vmul.f32 %v2799, 0.5
        %v2806 = vmul.f32 %v2801, 0.5
        %v2807 = vmul.f32 %v2795, 0.70710677
        %v2808 = vmul.f32 %v2797, 0.70710677
        %v2809 = vmul.f32 %v2799, 0.70710677
        %v2810 = vmul.f32 %v2801, 0.70710677
        %v2811 = verf.f32.pop %v2807
        %v2812 = verf.f32.pop %v2808
        %v2813 = verf.f32.pop %v2809
        %v2814 = verf.f32.pop %v2810
        %v2815 = vadd.f32 %v2811, 1.0
        %v2816 = vadd.f32 %v2812, 1.0
        %v2817 = vadd.f32 %v2813, 1.0
        %v2818 = vadd.f32 %v2814, 1.0
        %v2819 = vmul.f32 %v2803, %v2815
        %v2820 = vmul.f32 %v2804, %v2816
        %v2821 = vmul.f32 %v2805, %v2817
        %v2822 = vmul.f32 %v2806, %v2818
        %v2823 = vpack.c.bf16 %v2821, %v2819
        %v2824 = vpack.c.bf16 %v2822, %v2820
        %v2825 = vld [vmem:[#allocation11] sm:$0xf]
        %v2826 = vld [vmem:[#allocation11 + $0x4] sm:$0xf]
        %v2827 = vld [vmem:[#allocation11 + $0x8] sm:$0xf]
        %v2828 = vld [vmem:[#allocation11 + $0xc] sm:$0xf]
        %v2829 = vld [vmem:[#allocation11 + $0x10] sm:$0xf]
        %v2830 = vld [vmem:[#allocation11 + $0x14] sm:$0xf]
        %v2831 = vld [vmem:[#allocation11 + $0x18] sm:$0xf]
        %v2832 = vld [vmem:[#allocation11 + $0x1c] sm:$0xf]
        %v2833 = vld [vmem:[#allocation11 + $0x20] sm:$0xf]
        %v2834 = vld [vmem:[#allocation11 + $0x24] sm:$0xf]
        %v2835 = vld [vmem:[#allocation11 + $0x28] sm:$0xf]
        %v2836 = vld [vmem:[#allocation11 + $0x2c] sm:$0xf]
        %v2837 = vld [vmem:[#allocation11 + $0x30] sm:$0xf]
        %v2838 = vld [vmem:[#allocation11 + $0x34] sm:$0xf]
        %v2839 = vld [vmem:[#allocation11 + $0x38] sm:$0xf]
        %v2840 = vld [vmem:[#allocation11 + $0x3c] sm:$0xf]
        %v2841 = vld [vmem:[#allocation11 + $0x40] sm:$0xf]
        %v2842 = vld [vmem:[#allocation11 + $0x44] sm:$0xf]
        %v2843 = vld [vmem:[#allocation11 + $0x48] sm:$0xf]
        %v2844 = vld [vmem:[#allocation11 + $0x4c] sm:$0xf]
        %v2845 = vld [vmem:[#allocation11 + $0x50] sm:$0xf]
        %v2846 = vld [vmem:[#allocation11 + $0x54] sm:$0xf]
        %v2847 = vld [vmem:[#allocation11 + $0x58] sm:$0xf]
        %v2848 = vld [vmem:[#allocation11 + $0x5c] sm:$0xf]
        %v2849 = vld [vmem:[#allocation11 + $0x60] sm:$0xf]
        %v2850 = vld [vmem:[#allocation11 + $0x64] sm:$0xf]
        %v2851 = vld [vmem:[#allocation11 + $0x68] sm:$0xf]
        %v2852 = vld [vmem:[#allocation11 + $0x6c] sm:$0xf]
        %v2853 = vld [vmem:[#allocation11 + $0x70] sm:$0xf]
        %v2854 = vld [vmem:[#allocation11 + $0x74] sm:$0xf]
        %v2855 = vld [vmem:[#allocation11 + $0x78] sm:$0xf]
        %v2856 = vld [vmem:[#allocation11 + $0x7c] sm:$0xf]
        %v2857 = vld [vmem:[%s11] sm:$0x1]
        %v2859 = vlaneseq
        %v2860 = vshrl.u32 %v2859, 7
        %v2861 = vsub.s32 0, %v2860
        %v2862 = vrot.slane %v2857, %v2861
        %v2896 = vunpack.c.l.b16 %v2825
        %v2897 = vunpack.c.l.b16 %v2826
        %v2898 = vunpack.c.l.b16 %v2827
        %v2899 = vunpack.c.l.b16 %v2828
        %v2900 = vunpack.c.l.b16 %v2829
        %v2901 = vunpack.c.l.b16 %v2830
        %v2902 = vunpack.c.l.b16 %v2831
        %v2903 = vunpack.c.l.b16 %v2832
        %v2904 = vunpack.c.l.b16 %v2833
        %v2905 = vunpack.c.l.b16 %v2834
        %v2906 = vunpack.c.l.b16 %v2835
        %v2907 = vunpack.c.l.b16 %v2836
        %v2908 = vunpack.c.l.b16 %v2837
        %v2909 = vunpack.c.l.b16 %v2838
        %v2910 = vunpack.c.l.b16 %v2839
        %v2911 = vunpack.c.l.b16 %v2840
        %v2912 = vunpack.c.l.b16 %v2841
        %v2913 = vunpack.c.l.b16 %v2842
        %v2914 = vunpack.c.l.b16 %v2843
        %v2915 = vunpack.c.l.b16 %v2844
        %v2916 = vunpack.c.l.b16 %v2845
        %v2917 = vunpack.c.l.b16 %v2846
        %v2918 = vunpack.c.l.b16 %v2847
        %v2919 = vunpack.c.l.b16 %v2848
        %v2920 = vunpack.c.l.b16 %v2849
        %v2921 = vunpack.c.l.b16 %v2850
        %v2922 = vunpack.c.l.b16 %v2851
        %v2923 = vunpack.c.l.b16 %v2852
        %v2924 = vunpack.c.l.b16 %v2853
        %v2925 = vunpack.c.l.b16 %v2854
        %v2926 = vunpack.c.l.b16 %v2855
        %v2927 = vunpack.c.l.b16 %v2856
        %v2928 = vpack.c.b16 %v2897, %v2896
        %v2929 = vpack.c.b16 %v2899, %v2898
        %v2930 = vpack.c.b16 %v2901, %v2900
        %v2931 = vpack.c.b16 %v2903, %v2902
        %v2932 = vpack.c.b16 %v2905, %v2904
        %v2933 = vpack.c.b16 %v2907, %v2906
        %v2934 = vpack.c.b16 %v2909, %v2908
        %v2935 = vpack.c.b16 %v2911, %v2910
        %v2936 = vpack.c.b16 %v2913, %v2912
        %v2937 = vpack.c.b16 %v2915, %v2914
        %v2938 = vpack.c.b16 %v2917, %v2916
        %v2939 = vpack.c.b16 %v2919, %v2918
        %v2940 = vpack.c.b16 %v2921, %v2920
        %v2941 = vpack.c.b16 %v2923, %v2922
        %v2942 = vpack.c.b16 %v2925, %v2924
        %v2943 = vpack.c.b16 %v2927, %v2926
        %2960 = vmatprep.subr.bf16.mxu0 0
        %2961 = vmatpush1.bf16.msra.mxu0 %v2935
        %2962 = vmatprep.subr.bf16.mxu0 0
        %2963 = vmatpush1.bf16.msra.mxu0 %v2934
        %2964 = vmatprep.subr.bf16.mxu0 0
        %2965 = vmatpush1.bf16.msra.mxu0 %v2933
        %2966 = vmatprep.subr.bf16.mxu0 0
        %2967 = vmatpush1.bf16.msra.mxu0 %v2932
        %2968 = vmatprep.subr.bf16.mxu0 0
        %2969 = vmatpush1.bf16.msra.mxu0 %v2931
        %2970 = vmatprep.subr.bf16.mxu0 0
        %2971 = vmatpush1.bf16.msra.mxu0 %v2930
        %2972 = vmatprep.subr.bf16.mxu0 0
        %2973 = vmatpush1.bf16.msra.mxu0 %v2929
        %2974 = vmatprep.subr.bf16.mxu0 0
        %2975 = vmatpush1.bf16.msra.mxu0 %v2928
        %2976 = vmatprep.subr.bf16.mxu0 0
        %2977 = vmatpush2.bf16.msra.mxu0 %v2943
        %2978 = vmatprep.subr.bf16.mxu0 0
        %2979 = vmatpush2.bf16.msra.mxu0 %v2942
        %2980 = vmatprep.subr.bf16.mxu0 0
        %2981 = vmatpush2.bf16.msra.mxu0 %v2941
        %2982 = vmatprep.subr.bf16.mxu0 0
        %2983 = vmatpush2.bf16.msra.mxu0 %v2940
        %2984 = vmatprep.subr.bf16.mxu0 0
        %2985 = vmatpush2.bf16.msra.mxu0 %v2939
        %2986 = vmatprep.subr.bf16.mxu0 0
        %2987 = vmatpush2.bf16.msra.mxu0 %v2938
        %2988 = vmatprep.subr.bf16.mxu0 0
        %2989 = vmatpush2.bf16.msra.mxu0 %v2937
        %2990 = vmatprep.subr.bf16.mxu0 0
        %2991 = vmatpush2.bf16.msra.mxu0 %v2936
        %2992 = vmatprep.mubr.bf16.mxu0 %v2824
        %2993 = vmatmul.mubr.bf16.gmra.mxu0 %v2823
        %v2994 = vpop.f32.mrf.mxu0
        %v2995 = vadd.f32 %v2862, %v2994
        %v2996 = vpop.f32.mrf.mxu0
        %v2997 = vpop.f32.mrf.mxu0
        %v2998 = vadd.f32 %v2862, %v2997
        %v2999 = vpop.f32.mrf.mxu0
        %3000 = vdwg.mxu0
        %v3001 = vadd.f32 %v2601, %v2995
        %v3002 = vadd.f32 %v2602, %v2998
        %3003 = vst [vmem:[%s540] sm:$0xff] %v3001
        %3004 = vst [vmem:[%s540 + $0x8] sm:$0xff] %v3002
        %s3005 = sand.u32 %s302, 1
        %s3006 = scalar_lea.sflag [#allocation4], %s3005
        %s3007 = sand.u32 %s302, 1
        %s3008 = smul.addr %s3007, 16
        %s3009 = scalar_lea.vmem [#allocation13], %s3008
        %s3010 = sand.u32 %s328, 1
        %s3011 = scalar_lea.sflag [#allocation15], %s3010
        %s3012 = sand.u32 %s328, 1
        %s3013 = smul.addr %s3012, 16
        %s3014 = scalar_lea.vmem [#allocation14], %s3013
        // Predicated region
        $region93: #{tpu_custom_call.1} parent=67 // pred_check
          %p3015 = pneg %p312
        $region94: #{tpu_custom_call.1} parent=67 // pred_check_branch
          %3017 = sbr.rel (%p3015) target = $region96
        $region95: #{tpu_custom_call.1} parent=67 // pred_region
          %s3019 = ssub.s32 256, 256
          %3020 = vsyncadd %s3006, %s3019
          %s3021 = smul.addr %s37, 2
          %s3022 = smul.addr %s3021, 128
          %s3023 = scalar_lea.hbm %s12, %s3022
          %s3024 = sshll.u32 %s3009, 4
          %s3025 = int_to_ptr.vmem [resolvable:$true] %s3024
          %3030 = dma.vmem_to_hbm [thread:$0]  %s3025, 256, %s3023, %s3006, 128, 128, 8
        $region96: #{tpu_custom_call.1} parent=67 // pred_fallthru
          _
        // Predicated region
        $region97: #{tpu_custom_call.1} parent=67 // pred_check
          %p3031 = pneg %p338
        $region98: #{tpu_custom_call.1} parent=67 // pred_check_branch
          %3033 = sbr.rel (%p3031) target = $region100
        $region99: #{tpu_custom_call.1} parent=67 // pred_region
          %s3035 = ssub.s32 256, 256
          %3036 = vsyncadd %s3011, %s3035
          %s3037 = smul.addr %s37, 2
          %s3038 = smul.addr %s3037, 128
          %s3039 = scalar_lea.hbm %s13, %s3038
          %s3040 = sshll.u32 %s3014, 4
          %s3041 = int_to_ptr.vmem [resolvable:$true] %s3040
          %3046 = dma.vmem_to_hbm [thread:$0]  %s3041, 256, %s3039, %s3011, 128, 128, 8
        $region100: #{tpu_custom_call.1} parent=67 // pred_fallthru
          _
      $region68: #{tpu_custom_call.1} parent=5 // pred_fallthru
        _
      %p3047 = scmp.le.s32.totalorder 2, %s32
      // Predicated region
      $region101: #{tpu_custom_call.1} parent=5 // pred_check
        %p3048 = pneg %p3047
      $region102: #{tpu_custom_call.1} parent=5 // pred_check_branch
        %3050 = sbr.rel (%p3048) target = $region104
      $region103: #{tpu_custom_call.1} parent=5 // pred_region
        %s3051 = ssub.s32 %s32, 2
        // Predicated region
        $region105: #{tpu_custom_call.1} parent=103 // pred_check
          %p3052 = pneg %p318
        $region106: #{tpu_custom_call.1} parent=103 // pred_check_branch
          %3054 = sbr.rel (%p3052) target = $region108
        $region107: #{tpu_custom_call.1} parent=103 // pred_region
          %s3055 = sand.u32 %s303, 1
          %s3056 = scalar_lea.sflag [#allocation4], %s3055
          %s3057 = sand.u32 %s303, 1
          %s3058 = smul.addr %s3057, 16
          %s3059 = scalar_lea.vmem [#allocation13], %s3058
          %3060 = dma.done %s3056, 256
        $region108: #{tpu_custom_call.1} parent=103 // pred_fallthru
          _
        // Predicated region
        $region109: #{tpu_custom_call.1} parent=103 // pred_check
          %p3061 = pneg %p344
        $region110: #{tpu_custom_call.1} parent=103 // pred_check_branch
          %3063 = sbr.rel (%p3061) target = $region112
        $region111: #{tpu_custom_call.1} parent=103 // pred_region
          %s3064 = sand.u32 %s329, 1
          %s3065 = scalar_lea.sflag [#allocation15], %s3064
          %s3066 = sand.u32 %s329, 1
          %s3067 = smul.addr %s3066, 16
          %s3068 = scalar_lea.vmem [#allocation14], %s3067
          %3069 = dma.done %s3065, 256
        $region112: #{tpu_custom_call.1} parent=103 // pred_fallthru
          _
      $region104: #{tpu_custom_call.1} parent=5 // pred_fallthru
        _
    $region6: #{tpu_custom_call.1} parent=1 // loop_footer
      %s36 = sadd.s32 1, %s32
    $region7: #{tpu_custom_call.1} parent=1 // loop_footer_branch
      %31 = sbr.rel target = $region3
    $region8: #{tpu_custom_call.1} parent=1 // loop_exit
      _
    %3070 = vsyncpa [#allocation3], 1
    %s3071 = scalar_lea.sflag [#allocation3], 1
    %3072 = vsyncpa %s3071, 1
    %3073 = vsyncpa [#allocation6], 1
    %3074 = vsyncpa [#allocation9], 1
    %3075 = vsyncpa [#allocation12], 1
    %3076 = vsyncpa [#allocation4], 1
    %s3077 = scalar_lea.sflag [#allocation4], 1
    %3078 = vsyncpa %s3077, 1
    %3079 = vsyncpa [#allocation15], 1
    %s3080 = scalar_lea.sflag [#allocation15], 1
    %3081 = vsyncpa %s3080, 1

</llo_original>
